<compile_context>
chip_gen: v7x
topology: tpu7x:2x2x1
jax: 0.10.0
libtpu: 0.0.40
codegen_flags: <defaults>
</compile_context>

<pallas_src>
import functools

import jax
import jax.numpy as jnp
from jax import lax
from jax.experimental import pallas as pl
from jax.experimental.pallas import tpu as pltpu

HIDDEN = 10  # GCN hidden width from the torch module


# ---------------------------------------------------------------------------
# Stage 1: front-end projection  Hs = dinv * (tanh(x @ Wl + bl) @ Wg)
# ---------------------------------------------------------------------------
def frontend_kernel(x_ref, dinv_ref, wl_ref, bl_ref, wg_ref, hs_ref):
    y = jnp.tanh(jnp.dot(x_ref[...], wl_ref[...],
                         preferred_element_type=jnp.float32) + bl_ref[...])
    h = jnp.dot(y, wg_ref[...], preferred_element_type=jnp.float32)
    hs_ref[...] = (dinv_ref[...] * h).astype(hs_ref.dtype)


# ---------------------------------------------------------------------------
# Stage 2: tiled aggregation  H = tanh(dinv * ((A+I) @ Hs) + bg)
# grid = (rows, reduction); f32 accumulator in VMEM scratch; init at k==0,
# epilogue (row scaling + bias + tanh + store) at k==last.
# ---------------------------------------------------------------------------
def gcn_agg_kernel(a_ref, hs_ref, dinv_ref, bg_ref, h_ref, acc_ref):
    k = pl.program_id(1)

    @pl.when(k == 0)
    def _():
        acc_ref[...] = jnp.zeros_like(acc_ref)

    acc_ref[...] += jnp.dot(a_ref[...], hs_ref[...],
                            preferred_element_type=jnp.float32)

    @pl.when(k == pl.num_programs(1) - 1)
    def _():
        h_ref[...] = jnp.tanh(dinv_ref[...] * acc_ref[...] + bg_ref[...])


# ---------------------------------------------------------------------------
# Stage 3: output head  out = H @ Wo + bo  (kept off the big kernel's pipeline
# so the heavy kernel's output stays the lane-denser (tm, 10) slab)
# ---------------------------------------------------------------------------
def project_kernel(h_ref, wo_ref, bo_ref, out_ref):
    out_ref[...] = (jnp.dot(h_ref[...], wo_ref[...],
                            preferred_element_type=jnp.float32) + bo_ref[...])


@functools.partial(jax.jit, static_argnames=("tm", "tk"))
def model_forward(x, edge_index, params, *, tm=None, tk=None):
    wl, bl, wg, bg, wo, bo = params
    n, f_in = x.shape

    # Pad node count to a multiple of 128 so every block satisfies the (8, 128)
    # tiling constraint; padded rows/cols of A are zero and dinv=0 there.
    n_pad = ((n + 127) // 128) * 128
    if tm is None:
        tm = min(n_pad, 512)  # 512x512 bf16 A tiles fit double-buffered well
    if tk is None:
        tk = min(n_pad, 512)  # under the scoped VMEM default on v5e/v6e/v7x.

    src, dst = edge_index[0], edge_index[1]
    node_ids = jnp.arange(n, dtype=edge_index.dtype)

    # In-degree including self loops; duplicate edges are counted (PyG semantics).
    deg = jnp.zeros((n_pad,), jnp.float32).at[dst].add(1.0).at[node_ids].add(1.0)
    dinv = jnp.where(deg > 0.0, lax.rsqrt(deg), 0.0).reshape(n_pad, 1)

    # Raw (A + I) in bf16 (halves the dominant N^2 HBM read); duplicate edges
    # scatter-add, D^{-1/2} scaling applied inside the kernels.
    a = jnp.zeros((n_pad, n_pad), jnp.bfloat16)
    a = a.at[dst, src].add(jnp.ones(src.shape, jnp.bfloat16))
    a = a.at[node_ids, node_ids].add(jnp.ones(node_ids.shape, jnp.bfloat16))

    x_p = jnp.pad(x.astype(jnp.float32), ((0, n_pad - n), (0, 0)))

    # ---- stage 1: Hs = dinv * (tanh(x@Wl + bl) @ Wg), bf16 ----
    hs = pl.pallas_call(
        frontend_kernel,
        out_shape=jax.ShapeDtypeStruct((n_pad, HIDDEN), jnp.bfloat16),
        grid=(n_pad // tm,),
        in_specs=[
            pl.BlockSpec((tm, f_in), lambda i: (i, 0)),
            pl.BlockSpec((tm, 1), lambda i: (i, 0)),
            pl.BlockSpec(wl.shape, lambda i: (0, 0)),   # weights resident
            pl.BlockSpec(bl.shape, lambda i: (0, 0)),
            pl.BlockSpec(wg.shape, lambda i: (0, 0)),
        ],
        out_specs=pl.BlockSpec((tm, HIDDEN), lambda i: (i, 0)),
        compiler_params=pltpu.CompilerParams(dimension_semantics=("parallel",)),
    )(x_p, dinv, wl, bl, wg)

    # ---- stage 2: H = tanh(dinv * ((A+I) @ Hs) + bg), tiled over (rows, k) ----
    h = pl.pallas_call(
        gcn_agg_kernel,
        out_shape=jax.ShapeDtypeStruct((n_pad, HIDDEN), jnp.float32),
        grid=(n_pad // tm, n_pad // tk),
        in_specs=[
            pl.BlockSpec((tm, tk), lambda i, k: (i, k)),
            pl.BlockSpec((tk, HIDDEN), lambda i, k: (k, 0)),
            pl.BlockSpec((tm, 1), lambda i, k: (i, 0)),
            pl.BlockSpec(bg.shape, lambda i, k: (0, 0)),
        ],
        out_specs=pl.BlockSpec((tm, HIDDEN), lambda i, k: (i, 0)),
        scratch_shapes=[pltpu.VMEM((tm, HIDDEN), jnp.float32)],
        compiler_params=pltpu.CompilerParams(
            dimension_semantics=("parallel", "arbitrary"),
            vmem_limit_bytes=32 * 1024 * 1024,
        ),
        cost_estimate=pl.CostEstimate(
            flops=2 * n_pad * n_pad * HIDDEN,
            transcendentals=n_pad * HIDDEN,
            bytes_accessed=n_pad * n_pad * 2 + n_pad * HIDDEN * 6 + n_pad * 4,
        ),
    )(a, hs, dinv, bg)

    # ---- stage 3: out = H @ Wo + bo ----
    out = pl.pallas_call(
        project_kernel,
        out_shape=jax.ShapeDtypeStruct((n_pad, 1), jnp.float32),
        grid=(n_pad // tm,),
        in_specs=[
            pl.BlockSpec((tm, HIDDEN), lambda i: (i, 0)),
            pl.BlockSpec(wo.shape, lambda i: (0, 0)),
            pl.BlockSpec(bo.shape, lambda i: (0, 0)),
        ],
        out_specs=pl.BlockSpec((tm, 1), lambda i: (i, 0)),
        compiler_params=pltpu.CompilerParams(dimension_semantics=("parallel",)),
    )(h, wo, bo)

    return out[:n]


def init_params(key):
    """Deterministic PyTorch-style uniform(-1/sqrt(fan_in), +1/sqrt(fan_in)) init."""
    ks = jax.random.split(key, 6)

    def unif(k, shape, fan_in):
        bound = 1.0 / jnp.sqrt(float(fan_in))
        return jax.random.uniform(k, shape, jnp.float32, -bound, bound)

    wl = unif(ks[0], (5, HIDDEN), 5)             # Linear(5,10), stored (in, out)
    bl = unif(ks[1], (1, HIDDEN), 5)
    wg = unif(ks[2], (HIDDEN, HIDDEN), HIDDEN)   # GCNConv linear weight (in, out)
    bg = unif(ks[3], (1, HIDDEN), HIDDEN)        # GCNConv bias (added after aggregation)
    wo = unif(ks[4], (HIDDEN, 1), HIDDEN)        # Linear(10,1)
    bo = unif(ks[5], (1, 1), HIDDEN)
    return (wl, bl, wg, bg, wo, bo)


def reference_forward(x, edge_index, params):
    """Pure-JAX f32 reference (dense PyG GCNConv with summed duplicate edges)."""
    wl, bl, wg, bg, wo, bo = params
    n = x.shape[0]
    src, dst = edge_index[0], edge_index[1]
    a = jnp.zeros((n, n), jnp.float32).at[dst, src].add(1.0)
    a = a + jnp.eye(n, dtype=jnp.float32)
    deg = a.sum(axis=1)
    dinv = jnp.where(deg > 0, 1.0 / jnp.sqrt(deg), 0.0)
    a_hat = dinv[:, None] * a * dinv[None, :]
    y = jnp.tanh(x @ wl + bl)
    h = jnp.tanh(a_hat @ (y @ wg) + bg)
    return h @ wo + bo


if __name__ == "__main__":
    key = jax.random.PRNGKey(0)
    k_x, k_e, k_p = jax.random.split(key, 3)

    N, F_IN, E = 256, 5, 1024
    x = jax.random.uniform(k_x, (N, F_IN), jnp.float32)
    # random directed edges (source row, target row); duplicates allowed
    edge_index = jax.random.randint(k_e, (2, E), 0, N, jnp.int32)
    params = init_params(k_p)

    # tm=tk=128 exercises the (row, reduction) grid + accumulator at this small
    # size; defaults (512) apply for larger graphs.
    out = model_forward(x, edge_index, params, tm=128, tk=128)
    out = jax.block_until_ready(out)
    assert out.shape == (N, 1) and out.dtype == jnp.float32

    ref = reference_forward(x, edge_index, params)
    err = float(jnp.max(jnp.abs(out - ref)))
    assert err < 5e-2, f"max abs err {err}"
    print("KERNEL_OK")
</pallas_src>

<mosaic_0001>
module attributes {stable_mosaic.version = 11 : i64} {
  func.func private @main(%arg0: i32) attributes {dimension_semantics = [#tpu.dimension_semantics<core_parallel>], iteration_bounds = array<i64: 2>, tpu.core_type = #tpu.core_type<sc_scalar_subcore>, window_params = []} {
    return
  }
}

module attributes {stable_mosaic.version = 11 : i64} {
  func.func private @main(%arg0: i32) attributes {dimension_semantics = [#tpu.dimension_semantics<core_parallel>], iteration_bounds = array<i64: 2>, tpu.core_type = #tpu.core_type<sc_scalar_subcore>, window_params = []} {
    return
  }
}

module attributes {stable_mosaic.version = 11 : i64} {
  func.func @gcn_agg_kernel(%arg0: i32, %arg1: i32, %arg2: memref<128x128xbf16, #tpu.memory_space<vmem>>, %arg3: memref<128x10xbf16, #tpu.memory_space<vmem>>, %arg4: memref<128x1xf32, #tpu.memory_space<vmem>>, %arg5: memref<1x10xf32, #tpu.memory_space<vmem>>, %arg6: memref<128x10xf32, #tpu.memory_space<vmem>>, %arg7: memref<128x10xf32, #tpu.memory_space<vmem>>) attributes {dimension_semantics = [#tpu.dimension_semantics<parallel>, #tpu.dimension_semantics<arbitrary>], iteration_bounds = array<i64: 2, 2>, scalar_prefetch = 0 : i64, scratch_operands = 1 : i64, tpu.core_type = #tpu.core_type<tc>, window_params = [{transform_indices = @transform_0, window_bounds = array<i64: 128, 128>}, {transform_indices = @transform_1, window_bounds = array<i64: 128, 10>}, {transform_indices = @transform_2, window_bounds = array<i64: 128, 1>}, {pipeline_mode = #tpu.pipeline_mode<synchronous>, transform_indices = @transform_3, window_bounds = array<i64: 1, 10>}, {transform_indices = @transform_4, window_bounds = array<i64: 128, 10>}]} {
    %c0_i32 = arith.constant 0 : i32
    %0 = arith.cmpi eq, %arg1, %c0_i32 : i32
    %1 = arith.extui %0 : i1 to i32
    %c0_i32_0 = arith.constant 0 : i32
    %2 = arith.cmpi ne, %1, %c0_i32_0 : i32
    scf.if %2 {
      %cst_9 = arith.constant 0.000000e+00 : f32
      %12 = vector.broadcast %cst_9 : f32 to vector<128x10xf32>
      %c0_10 = arith.constant 0 : index
      %c0_11 = arith.constant 0 : index
      %13 = vector.load %arg7[%c0_10, %c0_11] : memref<128x10xf32, #tpu.memory_space<vmem>>, vector<128x10xf32>
      tpu.vector_store %arg7[%c0_10, %c0_11], %12 {strides = array<i32>} : memref<128x10xf32, #tpu.memory_space<vmem>>, vector<128x10xf32>,
    } else {
    }
    %c0 = arith.constant 0 : index
    %c0_1 = arith.constant 0 : index
    %3 = vector.load %arg7[%c0, %c0_1] : memref<128x10xf32, #tpu.memory_space<vmem>>, vector<128x10xf32>
    %c0_2 = arith.constant 0 : index
    %c0_3 = arith.constant 0 : index
    %4 = vector.load %arg2[%c0_2, %c0_3] : memref<128x128xbf16, #tpu.memory_space<vmem>>, vector<128x128xbf16>
    %c0_4 = arith.constant 0 : index
    %c0_5 = arith.constant 0 : index
    %5 = vector.load %arg3[%c0_4, %c0_5] : memref<128x10xbf16, #tpu.memory_space<vmem>>, vector<128x10xbf16>
    %cst = arith.constant dense<0.000000e+00> : vector<128x10xf32>
    %6 = tpu.matmul %4, %5, %cst {dimension_numbers = #tpu.dot_dimension_numbers<[1], [0], [0], [1], [0, 0, 1, 1], [], []>} : vector<128x128xbf16>, vector<128x10xbf16>, vector<128x10xf32> -> vector<128x10xf32>
    %7 = arith.addf %3, %6 : vector<128x10xf32>
    %c0_6 = arith.constant 0 : index
    %c0_7 = arith.constant 0 : index
    %8 = vector.load %arg7[%c0_6, %c0_7] : memref<128x10xf32, #tpu.memory_space<vmem>>, vector<128x10xf32>
    tpu.vector_store %arg7[%c0_6, %c0_7], %7 {strides = array<i32>} : memref<128x10xf32, #tpu.memory_space<vmem>>, vector<128x10xf32>,
    %c1_i32 = arith.constant 1 : i32
    %9 = arith.cmpi eq, %arg1, %c1_i32 : i32
    %10 = arith.extui %9 : i1 to i32
    %c0_i32_8 = arith.constant 0 : i32
    %11 = arith.cmpi ne, %10, %c0_i32_8 : i32
    scf.if %11 {
      %c0_9 = arith.constant 0 : index
      %c0_10 = arith.constant 0 : index
      %12 = vector.load %arg4[%c0_9, %c0_10] : memref<128x1xf32, #tpu.memory_space<vmem>>, vector<128x1xf32>
      %c0_11 = arith.constant 0 : index
      %c0_12 = arith.constant 0 : index
      %13 = vector.load %arg7[%c0_11, %c0_12] : memref<128x10xf32, #tpu.memory_space<vmem>>, vector<128x10xf32>
      %14 = vector.broadcast %12 : vector<128x1xf32> to vector<128x10xf32>
      %15 = arith.mulf %14, %13 : vector<128x10xf32>
      %c0_13 = arith.constant 0 : index
      %c0_14 = arith.constant 0 : index
      %16 = vector.load %arg5[%c0_13, %c0_14] : memref<1x10xf32, #tpu.memory_space<vmem>>, vector<1x10xf32>
      %17 = vector.broadcast %16 : vector<1x10xf32> to vector<128x10xf32>
      %18 = arith.addf %15, %17 : vector<128x10xf32>
      %19 = math.tanh %18 : vector<128x10xf32>
      %c0_15 = arith.constant 0 : index
      %c0_16 = arith.constant 0 : index
      %20 = vector.load %arg6[%c0_15, %c0_16] : memref<128x10xf32, #tpu.memory_space<vmem>>, vector<128x10xf32>
      tpu.vector_store %arg6[%c0_15, %c0_16], %19 {strides = array<i32>} : memref<128x10xf32, #tpu.memory_space<vmem>>, vector<128x10xf32>,
    } else {
    }
    return
  }
  func.func @transform_0(%arg0: i32, %arg1: i32) -> (i32, i32) {
    %c0_i32 = arith.constant 0 : i32
    return %arg0, %arg1 : i32, i32
  }
  func.func @transform_1(%arg0: i32, %arg1: i32) -> (i32, i32) {
    %c0_i32 = arith.constant 0 : i32
    %c0_i32_0 = arith.constant 0 : i32
    return %arg1, %c0_i32 : i32, i32
  }
  func.func @transform_2(%arg0: i32, %arg1: i32) -> (i32, i32) {
    %c0_i32 = arith.constant 0 : i32
    %c0_i32_0 = arith.constant 0 : i32
    return %arg0, %c0_i32 : i32, i32
  }
  func.func @transform_3(%arg0: i32, %arg1: i32) -> (i32, i32) {
    %c0_i32 = arith.constant 0 : i32
    %c0_i32_0 = arith.constant 0 : i32
    %c0_i32_1 = arith.constant 0 : i32
    return %c0_i32, %c0_i32_0 : i32, i32
  }
  func.func @transform_4(%arg0: i32, %arg1: i32) -> (i32, i32) {
    %c0_i32 = arith.constant 0 : i32
    %c0_i32_0 = arith.constant 0 : i32
    return %arg0, %c0_i32 : i32, i32
  }
}

module attributes {stable_mosaic.version = 11 : i64} {
  func.func @frontend_kernel(%arg0: i32, %arg1: memref<128x5xf32, #tpu.memory_space<vmem>>, %arg2: memref<128x1xf32, #tpu.memory_space<vmem>>, %arg3: memref<5x10xf32, #tpu.memory_space<vmem>>, %arg4: memref<1x10xf32, #tpu.memory_space<vmem>>, %arg5: memref<10x10xf32, #tpu.memory_space<vmem>>, %arg6: memref<128x10xbf16, #tpu.memory_space<vmem>>) attributes {dimension_semantics = [#tpu.dimension_semantics<parallel>], iteration_bounds = array<i64: 2>, scalar_prefetch = 0 : i64, scratch_operands = 0 : i64, tpu.core_type = #tpu.core_type<tc>, window_params = [{transform_indices = @transform_0, window_bounds = array<i64: 128, 5>}, {transform_indices = @transform_1, window_bounds = array<i64: 128, 1>}, {pipeline_mode = #tpu.pipeline_mode<synchronous>, transform_indices = @transform_2, window_bounds = array<i64: 5, 10>}, {pipeline_mode = #tpu.pipeline_mode<synchronous>, transform_indices = @transform_3, window_bounds = array<i64: 1, 10>}, {pipeline_mode = #tpu.pipeline_mode<synchronous>, transform_indices = @transform_4, window_bounds = array<i64: 10, 10>}, {transform_indices = @transform_5, window_bounds = array<i64: 128, 10>}]} {
    %c0 = arith.constant 0 : index
    %c0_0 = arith.constant 0 : index
    %0 = vector.load %arg1[%c0, %c0_0] : memref<128x5xf32, #tpu.memory_space<vmem>>, vector<128x5xf32>
    %c0_1 = arith.constant 0 : index
    %c0_2 = arith.constant 0 : index
    %1 = vector.load %arg3[%c0_1, %c0_2] : memref<5x10xf32, #tpu.memory_space<vmem>>, vector<5x10xf32>
    %cst = arith.constant dense<0.000000e+00> : vector<128x10xf32>
    %2 = tpu.matmul %0, %1, %cst {dimension_numbers = #tpu.dot_dimension_numbers<[1], [0], [0], [1], [0, 0, 1, 1], [], []>} : vector<128x5xf32>, vector<5x10xf32>, vector<128x10xf32> -> vector<128x10xf32>
    %c0_3 = arith.constant 0 : index
    %c0_4 = arith.constant 0 : index
    %3 = vector.load %arg4[%c0_3, %c0_4] : memref<1x10xf32, #tpu.memory_space<vmem>>, vector<1x10xf32>
    %4 = vector.broadcast %3 : vector<1x10xf32> to vector<128x10xf32>
    %5 = arith.addf %2, %4 : vector<128x10xf32>
    %6 = math.tanh %5 : vector<128x10xf32>
    %c0_5 = arith.constant 0 : index
    %c0_6 = arith.constant 0 : index
    %7 = vector.load %arg5[%c0_5, %c0_6] : memref<10x10xf32, #tpu.memory_space<vmem>>, vector<10x10xf32>
    %cst_7 = arith.constant dense<0.000000e+00> : vector<128x10xf32>
    %8 = tpu.matmul %6, %7, %cst_7 {dimension_numbers = #tpu.dot_dimension_numbers<[1], [0], [0], [1], [0, 0, 1, 1], [], []>} : vector<128x10xf32>, vector<10x10xf32>, vector<128x10xf32> -> vector<128x10xf32>
    %c0_8 = arith.constant 0 : index
    %c0_9 = arith.constant 0 : index
    %9 = vector.load %arg2[%c0_8, %c0_9] : memref<128x1xf32, #tpu.memory_space<vmem>>, vector<128x1xf32>
    %10 = vector.broadcast %9 : vector<128x1xf32> to vector<128x10xf32>
    %11 = arith.mulf %10, %8 : vector<128x10xf32>
    %12 = arith.truncf %11 : vector<128x10xf32> to vector<128x10xbf16>
    %c0_10 = arith.constant 0 : index
    %c0_11 = arith.constant 0 : index
    %13 = vector.load %arg6[%c0_10, %c0_11] : memref<128x10xbf16, #tpu.memory_space<vmem>>, vector<128x10xbf16>
    tpu.vector_store %arg6[%c0_10, %c0_11], %12 {strides = array<i32>} : memref<128x10xbf16, #tpu.memory_space<vmem>>, vector<128x10xbf16>,
    return
  }
  func.func @transform_0(%arg0: i32) -> (i32, i32) {
    %c0_i32 = arith.constant 0 : i32
    %c0_i32_0 = arith.constant 0 : i32
    return %arg0, %c0_i32 : i32, i32
  }
  func.func @transform_1(%arg0: i32) -> (i32, i32) {
    %c0_i32 = arith.constant 0 : i32
    %c0_i32_0 = arith.constant 0 : i32
    return %arg0, %c0_i32 : i32, i32
  }
  func.func @transform_2(%arg0: i32) -> (i32, i32) {
    %c0_i32 = arith.constant 0 : i32
    %c0_i32_0 = arith.constant 0 : i32
    %c0_i32_1 = arith.constant 0 : i32
    return %c0_i32, %c0_i32_0 : i32, i32
  }
  func.func @transform_3(%arg0: i32) -> (i32, i32) {
    %c0_i32 = arith.constant 0 : i32
    %c0_i32_0 = arith.constant 0 : i32
    %c0_i32_1 = arith.constant 0 : i32
    return %c0_i32, %c0_i32_0 : i32, i32
  }
  func.func @transform_4(%arg0: i32) -> (i32, i32) {
    %c0_i32 = arith.constant 0 : i32
    %c0_i32_0 = arith.constant 0 : i32
    %c0_i32_1 = arith.constant 0 : i32
    return %c0_i32, %c0_i32_0 : i32, i32
  }
  func.func @transform_5(%arg0: i32) -> (i32, i32) {
    %c0_i32 = arith.constant 0 : i32
    %c0_i32_0 = arith.constant 0 : i32
    return %arg0, %c0_i32 : i32, i32
  }
}

module attributes {stable_mosaic.version = 11 : i64} {
  func.func @project_kernel(%arg0: i32, %arg1: memref<128x10xf32, #tpu.memory_space<vmem>>, %arg2: memref<10x1xf32, #tpu.memory_space<vmem>>, %arg3: memref<1x1xf32, #tpu.memory_space<vmem>>, %arg4: memref<128x1xf32, #tpu.memory_space<vmem>>) attributes {dimension_semantics = [#tpu.dimension_semantics<parallel>], iteration_bounds = array<i64: 2>, scalar_prefetch = 0 : i64, scratch_operands = 0 : i64, tpu.core_type = #tpu.core_type<tc>, window_params = [{transform_indices = @transform_0, window_bounds = array<i64: 128, 10>}, {pipeline_mode = #tpu.pipeline_mode<synchronous>, transform_indices = @transform_1, window_bounds = array<i64: 10, 1>}, {pipeline_mode = #tpu.pipeline_mode<synchronous>, transform_indices = @transform_2, window_bounds = array<i64: 1, 1>}, {transform_indices = @transform_3, window_bounds = array<i64: 128, 1>}]} {
    %c0 = arith.constant 0 : index
    %c0_0 = arith.constant 0 : index
    %0 = vector.load %arg1[%c0, %c0_0] : memref<128x10xf32, #tpu.memory_space<vmem>>, vector<128x10xf32>
    %c0_1 = arith.constant 0 : index
    %c0_2 = arith.constant 0 : index
    %1 = vector.load %arg2[%c0_1, %c0_2] : memref<10x1xf32, #tpu.memory_space<vmem>>, vector<10x1xf32>
    %cst = arith.constant dense<0.000000e+00> : vector<128x1xf32>
    %2 = tpu.matmul %0, %1, %cst {dimension_numbers = #tpu.dot_dimension_numbers<[1], [0], [0], [1], [0, 0, 1, 1], [], []>} : vector<128x10xf32>, vector<10x1xf32>, vector<128x1xf32> -> vector<128x1xf32>
    %c0_3 = arith.constant 0 : index
    %c0_4 = arith.constant 0 : index
    %3 = vector.load %arg3[%c0_3, %c0_4] : memref<1x1xf32, #tpu.memory_space<vmem>>, vector<1x1xf32>
    %4 = vector.broadcast %3 : vector<1x1xf32> to vector<128x1xf32>
    %5 = arith.addf %2, %4 : vector<128x1xf32>
    %c0_5 = arith.constant 0 : index
    %c0_6 = arith.constant 0 : index
    %6 = vector.load %arg4[%c0_5, %c0_6] : memref<128x1xf32, #tpu.memory_space<vmem>>, vector<128x1xf32>
    tpu.vector_store %arg4[%c0_5, %c0_6], %5 {strides = array<i32>} : memref<128x1xf32, #tpu.memory_space<vmem>>, vector<128x1xf32>,
    return
  }
  func.func @transform_0(%arg0: i32) -> (i32, i32) {
    %c0_i32 = arith.constant 0 : i32
    %c0_i32_0 = arith.constant 0 : i32
    return %arg0, %c0_i32 : i32, i32
  }
  func.func @transform_1(%arg0: i32) -> (i32, i32) {
    %c0_i32 = arith.constant 0 : i32
    %c0_i32_0 = arith.constant 0 : i32
    %c0_i32_1 = arith.constant 0 : i32
    return %c0_i32, %c0_i32_0 : i32, i32
  }
  func.func @transform_2(%arg0: i32) -> (i32, i32) {
    %c0_i32 = arith.constant 0 : i32
    %c0_i32_0 = arith.constant 0 : i32
    %c0_i32_1 = arith.constant 0 : i32
    return %c0_i32, %c0_i32_0 : i32, i32
  }
  func.func @transform_3(%arg0: i32) -> (i32, i32) {
    %c0_i32 = arith.constant 0 : i32
    %c0_i32_0 = arith.constant 0 : i32
    return %arg0, %c0_i32 : i32, i32
  }
}

</mosaic_0001>

<llo_original>
// kernel: model_forward.4
$region0: #{model_forward.4}
  #allocation0 [shape = 'u32[]', space=smem, size = 0x4, offset = 0x4, fixed_abs, tag = 'smem constant byte address 0x4 - core index']
  #allocation1 [shape = 'u32[144,128]{1,0:T(1,128)}', space=vmem, size = 0x12000, scoped, tag = 'internal scratch']
  #allocation2 [shape = 'f32[128,10]{1,0:T(8,128)}', space=vmem, size = 0x10000, scoped, tag = 'scratch operand']
  %s0 = inlined_call_operand.vmem [shape: bf16[256,256], index: 0, kind: input, shape index: {}]
  %s1 = inlined_call_operand.vmem [shape: bf16[256,10], index: 1, kind: input, shape index: {}]
  %s2 = inlined_call_operand.vmem [shape: f32[256,1], index: 2, kind: input, shape index: {}]
  %s3 = inlined_call_operand.vmem [shape: f32[1,10], index: 3, kind: input, shape index: {}]
  %s4 = inlined_call_operand.vmem [shape: f32[256,10], index: 4, kind: output, shape index: {}]
  %s5 = sld [smem:[#allocation0]]
  $region98: #{model_forward.4} parent=0
    _
  %s7 = ssub.s32 1, %s5
  %s8 = scalar_select 0, %s7, %s5
  $region1: #{model_forward.4} parent=0
    #allocation3 [shape = 'u8[65536]{0}', space=vmem, size = 0x10000, scoped, tag = 'input window, operand 0']
    loop: start=0, step=1, limit=6
    $region2: #{model_forward.4} parent=1 // loop_pre_header
      _
    $region3: #{model_forward.4} parent=1 // loop_header
      %s10 = sphi 0, %s14
      %p11 = scmp.ge.s32.totalorder %s10, 6
      %s17 = sphi 0, %s29
      %s18 = sphi 0, %s25
      %s19 = sphi 0, %s17
      %s20 = sphi 0, %s18
      %s21 = sphi 0, %s19
      %s22 = sphi 0, %s20
      %s34 = sphi 0, %s36
      %s37 = sphi 0, %s34
      %s38 = sphi 0, %s37
      %s54 = sphi 0, %s38
      %s60 = sphi 0, %s62
      %s63 = sphi 0, %s60
      %s64 = sphi 0, %s63
      %s80 = sphi 0, %s64
      %s86 = sphi 0, %s88
      %s89 = sphi 0, %s86
      %s90 = sphi 0, %s89
      %s106 = sphi 0, %s90
      %s110 = sphi 0, %s110
      %s112 = sphi 0, %s110
      %s113 = sphi 0, %s112
      %s127 = sphi 0, %s113
      %s133 = sphi 0, %s135
      %s136 = sphi 0, %s133
      %s137 = sphi 0, %s136
      %s153 = sphi 0, %s137
    $region4: #{model_forward.4} parent=1 // loop_header_branch
      %13 = sbr.rel (%p11) target = $region8
    $region5: #{model_forward.4} parent=1 // loop_body
      %s15 = ssub.s32 %s10, 1
      %s16 = ssub.s32 %s10, 2
      %s23 = sadd.s32 1, %s18
      %p24 = scmp.ge.s32.totalorder %s23, 2
      %s25 = scalar_select %p24, 0, %s23
      %s26 = sadd.s32 1, %s17
      %s27 = scalar_select %p24, %s26, %s17
      %p28 = scmp.ge.s32.totalorder %s27, 2
      %s29 = scalar_select %p28, 0, %s27
      %s30 = ssub.s32 %s17, %s29
      %s31 = ssub.s32 %s18, %s25
      %s32 = sor.u32 %s30, %s31
      %p33 = scmp.eq.s32.totalorder %s32, 0
      %s35 = sadd.s32 %s34, 1
      %s36 = scalar_select %p33, %s34, %s35
      %p39 = pneg %p33
      %p40 = scmp.eq.s32.totalorder %s10, 3
      %p41 = por %p39, %p40
      %p42 = scmp.ne.s32.totalorder %s34, %s37
      %p43 = scmp.eq.s32.totalorder %s10, 0
      %p44 = por %p42, %p43
      %p45 = scmp.ne.s32.totalorder %s34, %s37
      %p46 = scmp.eq.s32.totalorder %s15, 3
      %p47 = por %p45, %p46
      %p48 = scmp.ne.s32.totalorder %s37, %s38
      %p49 = scmp.eq.s32.totalorder %s15, 0
      %p50 = por %p48, %p49
      %p51 = scmp.ne.s32.totalorder %s37, %s38
      %p52 = scmp.eq.s32.totalorder %s16, 3
      %p53 = por %p51, %p52
      %p55 = scmp.ne.s32.totalorder %s38, %s54
      %p56 = scmp.eq.s32.totalorder %s16, 0
      %p57 = por %p55, %p56
      %s58 = ssub.s32 %s18, %s25
      %p59 = scmp.eq.s32.totalorder %s58, 0
      %s61 = sadd.s32 %s60, 1
      %s62 = scalar_select %p59, %s60, %s61
      %p65 = pneg %p59
      %p66 = scmp.eq.s32.totalorder %s10, 3
      %p67 = por %p65, %p66
      %p68 = scmp.ne.s32.totalorder %s60, %s63
      %p69 = scmp.eq.s32.totalorder %s10, 0
      %p70 = por %p68, %p69
      %p71 = scmp.ne.s32.totalorder %s60, %s63
      %p72 = scmp.eq.s32.totalorder %s15, 3
      %p73 = por %p71, %p72
      %p74 = scmp.ne.s32.totalorder %s63, %s64
      %p75 = scmp.eq.s32.totalorder %s15, 0
      %p76 = por %p74, %p75
      %p77 = scmp.ne.s32.totalorder %s63, %s64
      %p78 = scmp.eq.s32.totalorder %s16, 3
      %p79 = por %p77, %p78
      %p81 = scmp.ne.s32.totalorder %s64, %s80
      %p82 = scmp.eq.s32.totalorder %s16, 0
      %p83 = por %p81, %p82
      %s84 = ssub.s32 %s17, %s29
      %p85 = scmp.eq.s32.totalorder %s84, 0
      %s87 = sadd.s32 %s86, 1
      %s88 = scalar_select %p85, %s86, %s87
      %p91 = pneg %p85
      %p92 = scmp.eq.s32.totalorder %s10, 3
      %p93 = por %p91, %p92
      %p94 = scmp.ne.s32.totalorder %s86, %s89
      %p95 = scmp.eq.s32.totalorder %s10, 0
      %p96 = por %p94, %p95
      %p97 = scmp.ne.s32.totalorder %s86, %s89
      %p98 = scmp.eq.s32.totalorder %s15, 3
      %p99 = por %p97, %p98
      %p100 = scmp.ne.s32.totalorder %s89, %s90
      %p101 = scmp.eq.s32.totalorder %s15, 0
      %p102 = por %p100, %p101
      %p103 = scmp.ne.s32.totalorder %s89, %s90
      %p104 = scmp.eq.s32.totalorder %s16, 3
      %p105 = por %p103, %p104
      %p107 = scmp.ne.s32.totalorder %s90, %s106
      %p108 = scmp.eq.s32.totalorder %s16, 0
      %p109 = por %p107, %p108
      %s111 = sadd.s32 %s110, 1
      %p114 = scmp.eq.s32.totalorder %s10, 3
      %p115 = scmp.ne.s32.totalorder %s110, %s112
      %p116 = scmp.eq.s32.totalorder %s10, 0
      %p117 = por %p115, %p116
      %p118 = scmp.ne.s32.totalorder %s110, %s112
      %p119 = scmp.eq.s32.totalorder %s15, 3
      %p120 = por %p118, %p119
      %p121 = scmp.ne.s32.totalorder %s112, %s113
      %p122 = scmp.eq.s32.totalorder %s15, 0
      %p123 = por %p121, %p122
      %p124 = scmp.ne.s32.totalorder %s112, %s113
      %p125 = scmp.eq.s32.totalorder %s16, 3
      %p126 = por %p124, %p125
      %p128 = scmp.ne.s32.totalorder %s113, %s127
      %p129 = scmp.eq.s32.totalorder %s16, 0
      %p130 = por %p128, %p129
      %s131 = ssub.s32 %s17, %s29
      %p132 = scmp.eq.s32.totalorder %s131, 0
      %s134 = sadd.s32 %s133, 1
      %s135 = scalar_select %p132, %s133, %s134
      %p138 = pneg %p132
      %p139 = scmp.eq.s32.totalorder %s10, 3
      %p140 = por %p138, %p139
      %p141 = scmp.ne.s32.totalorder %s133, %s136
      %p142 = scmp.eq.s32.totalorder %s10, 0
      %p143 = por %p141, %p142
      %p144 = scmp.ne.s32.totalorder %s133, %s136
      %p145 = scmp.eq.s32.totalorder %s15, 3
      %p146 = por %p144, %p145
      %p147 = scmp.ne.s32.totalorder %s136, %s137
      %p148 = scmp.eq.s32.totalorder %s15, 0
      %p149 = por %p147, %p148
      %p150 = scmp.ne.s32.totalorder %s136, %s137
      %p151 = scmp.eq.s32.totalorder %s16, 3
      %p152 = por %p150, %p151
      %p154 = scmp.ne.s32.totalorder %s137, %s153
      %p155 = scmp.eq.s32.totalorder %s16, 0
      %p156 = por %p154, %p155
      %p157 = scmp.le.s32.totalorder 1, %s10
      %p158 = scmp.lt.s32.totalorder %s10, 5
      %p159 = pnand %p157, %p158
      %p160 = pneg %p159
      // Predicated region
      $region9: #{model_forward.4} parent=5 // pred_check
        _
      $region10: #{model_forward.4} parent=5 // pred_check_branch
        %162 = sbr.rel (%p159) target = $region12
      $region11: #{model_forward.4} parent=5 // pred_region
        %s163 = ssub.s32 %s10, 1
        // Predicated region
        $region13: #{model_forward.4} parent=11 // pred_check
          %p164 = pneg %p123
        $region14: #{model_forward.4} parent=11 // pred_check_branch
          %166 = sbr.rel (%p164) target = $region16
        $region15: #{model_forward.4} parent=11 // pred_region
          _
        $region16: #{model_forward.4} parent=11 // pred_fallthru
          _
      $region12: #{model_forward.4} parent=5 // pred_fallthru
        _
      %p167 = scmp.lt.s32.totalorder %s10, 4
      // Predicated region
      $region17: #{model_forward.4} parent=5 // pred_check
        %p168 = pneg %p167
      $region18: #{model_forward.4} parent=5 // pred_check_branch
        %170 = sbr.rel (%p168) target = $region20
      $region19: #{model_forward.4} parent=5 // pred_region
        // Predicated region
        $region21: #{model_forward.4} parent=19 // pred_check
          %p171 = pneg %p44
        $region22: #{model_forward.4} parent=19 // pred_check_branch
          %173 = sbr.rel (%p171) target = $region24
        $region23: #{model_forward.4} parent=19 // pred_region
          %s174 = sand.u32 %s34, 1
          %s175 = sand.u32 %s34, 1
          %s176 = smul.addr %s175, 64
          %s177 = scalar_lea.vmem [#allocation3], %s176
          %s178 = smul.u32 16, %s17
          %s179 = smul.addr %s178, 2
          %s180 = sadd.s32 %s18, %s179
          %s181 = smul.addr %s180, 4
          %s182 = scalar_lea.vmem %s0, %s181
          // Predicated region
          $region25: #{model_forward.4} parent=23 // pred_check
            _
          $region26: #{model_forward.4} parent=23 // pred_check_branch
            %184 = sbr.rel (0) target = $region28
          $region27: #{model_forward.4} parent=23 // pred_region
            // Predicated region
            $region29: #{model_forward.4} parent=27 // pred_check
              _
            $region30: #{model_forward.4} parent=27 // pred_check_branch
              %186 = sbr.rel target = $region32
            $region31: #{model_forward.4} parent=27 // pred_region
              // Predicated region
              $region44: #{model_forward.4} parent=31 // pred_check
                _
              $region45: #{model_forward.4} parent=31 // pred_check_branch
                %231 = sbr.rel (0) target = $region47
              $region46: #{model_forward.4} parent=31 // pred_region
                loop: start=0, step=1, limit=1
                $region48: #{model_forward.4} parent=46 // loop_pre_header
                  _
                $region49: #{model_forward.4} parent=46 // loop_header
                  %s233 = sphi 0, %s237
                  %p234 = scmp.ge.s32.totalorder %s233, 1
                  %s238 = sphi %s182, %s182
                  %s239 = sphi %s177, %s177
                $region50: #{model_forward.4} parent=46 // loop_header_branch
                  %236 = sbr.rel (%p234) target = $region54
                $region51: #{model_forward.4} parent=46 // loop_body
                  _
                $region52: #{model_forward.4} parent=46 // loop_footer
                  %s237 = sadd.s32 1, %s233
                $region53: #{model_forward.4} parent=46 // loop_footer_branch
                  %232 = sbr.rel target = $region49
                $region54: #{model_forward.4} parent=46 // loop_exit
                  _
                loop: start=0, step=1, limit=1
                $region55: #{model_forward.4} parent=46 // loop_pre_header
                  _
                $region56: #{model_forward.4} parent=46 // loop_header
                  %s242 = sphi 0, %s246
                  %p243 = scmp.ge.s32.totalorder %s242, 1
                  %s247 = sphi %s182, %s182
                  %s248 = sphi %s177, %s177
                $region57: #{model_forward.4} parent=46 // loop_header_branch
                  %245 = sbr.rel (%p243) target = $region61
                $region58: #{model_forward.4} parent=46 // loop_body
                  %v249 = vld [vmem:[%s247] sm:$0xf]
                  %250 = vst [vmem:[%s248] sm:$0xf] %v249
                  %v251 = vld [vmem:[%s247 + $0x8] sm:$0xf]
                  %252 = vst [vmem:[%s248 + $0x4] sm:$0xf] %v251
                  %v253 = vld [vmem:[%s247 + $0x10] sm:$0xf]
                  %254 = vst [vmem:[%s248 + $0x8] sm:$0xf] %v253
                  %v255 = vld [vmem:[%s247 + $0x18] sm:$0xf]
                  %256 = vst [vmem:[%s248 + $0xc] sm:$0xf] %v255
                  %v257 = vld [vmem:[%s247 + $0x20] sm:$0xf]
                  %258 = vst [vmem:[%s248 + $0x10] sm:$0xf] %v257
                  %v259 = vld [vmem:[%s247 + $0x28] sm:$0xf]
                  %260 = vst [vmem:[%s248 + $0x14] sm:$0xf] %v259
                  %v261 = vld [vmem:[%s247 + $0x30] sm:$0xf]
                  %262 = vst [vmem:[%s248 + $0x18] sm:$0xf] %v261
                  %v263 = vld [vmem:[%s247 + $0x38] sm:$0xf]
                  %264 = vst [vmem:[%s248 + $0x1c] sm:$0xf] %v263
                  %v265 = vld [vmem:[%s247 + $0x40] sm:$0xf]
                  %266 = vst [vmem:[%s248 + $0x20] sm:$0xf] %v265
                  %v267 = vld [vmem:[%s247 + $0x48] sm:$0xf]
                  %268 = vst [vmem:[%s248 + $0x24] sm:$0xf] %v267
                  %v269 = vld [vmem:[%s247 + $0x50] sm:$0xf]
                  %270 = vst [vmem:[%s248 + $0x28] sm:$0xf] %v269
                  %v271 = vld [vmem:[%s247 + $0x58] sm:$0xf]
                  %272 = vst [vmem:[%s248 + $0x2c] sm:$0xf] %v271
                  %v273 = vld [vmem:[%s247 + $0x60] sm:$0xf]
                  %274 = vst [vmem:[%s248 + $0x30] sm:$0xf] %v273
                  %v275 = vld [vmem:[%s247 + $0x68] sm:$0xf]
                  %276 = vst [vmem:[%s248 + $0x34] sm:$0xf] %v275
                  %v277 = vld [vmem:[%s247 + $0x70] sm:$0xf]
                  %278 = vst [vmem:[%s248 + $0x38] sm:$0xf] %v277
                  %v279 = vld [vmem:[%s247 + $0x78] sm:$0xf]
                  %280 = vst [vmem:[%s248 + $0x3c] sm:$0xf] %v279
                $region59: #{model_forward.4} parent=46 // loop_footer
                  %s246 = sadd.s32 1, %s242
                $region60: #{model_forward.4} parent=46 // loop_footer_branch
                  %241 = sbr.rel target = $region56
                $region61: #{model_forward.4} parent=46 // loop_exit
                  _
              $region47: #{model_forward.4} parent=31 // pred_fallthru
                _
            $region32: #{model_forward.4} parent=27 // pred_fallthru
              _
            // Predicated region
            $region33: #{model_forward.4} parent=27 // pred_check
              _
            $region34: #{model_forward.4} parent=27 // pred_check_branch
              %188 = sbr.rel (0) target = $region36
            $region35: #{model_forward.4} parent=27 // pred_region
              loop: start=0, step=1, limit=1
              $region37: #{model_forward.4} parent=35 // loop_pre_header
                _
              $region38: #{model_forward.4} parent=35 // loop_header
                %s191 = sphi 0, %s195
                %p192 = scmp.ge.s32.totalorder %s191, 1
                %s196 = sphi %s182, %s182
                %s197 = sphi %s177, %s177
              $region39: #{model_forward.4} parent=35 // loop_header_branch
                %194 = sbr.rel (%p192) target = $region43
              $region40: #{model_forward.4} parent=35 // loop_body
                %v198 = vld [vmem:[%s196] sm:$0xf]
                %199 = vst [vmem:[%s197] sm:$0xf] %v198
                %v200 = vld [vmem:[%s196 + $0x8] sm:$0xf]
                %201 = vst [vmem:[%s197 + $0x4] sm:$0xf] %v200
                %v202 = vld [vmem:[%s196 + $0x10] sm:$0xf]
                %203 = vst [vmem:[%s197 + $0x8] sm:$0xf] %v202
                %v204 = vld [vmem:[%s196 + $0x18] sm:$0xf]
                %205 = vst [vmem:[%s197 + $0xc] sm:$0xf] %v204
                %v206 = vld [vmem:[%s196 + $0x20] sm:$0xf]
                %207 = vst [vmem:[%s197 + $0x10] sm:$0xf] %v206
                %v208 = vld [vmem:[%s196 + $0x28] sm:$0xf]
                %209 = vst [vmem:[%s197 + $0x14] sm:$0xf] %v208
                %v210 = vld [vmem:[%s196 + $0x30] sm:$0xf]
                %211 = vst [vmem:[%s197 + $0x18] sm:$0xf] %v210
                %v212 = vld [vmem:[%s196 + $0x38] sm:$0xf]
                %213 = vst [vmem:[%s197 + $0x1c] sm:$0xf] %v212
                %v214 = vld [vmem:[%s196 + $0x40] sm:$0xf]
                %215 = vst [vmem:[%s197 + $0x20] sm:$0xf] %v214
                %v216 = vld [vmem:[%s196 + $0x48] sm:$0xf]
                %217 = vst [vmem:[%s197 + $0x24] sm:$0xf] %v216
                %v218 = vld [vmem:[%s196 + $0x50] sm:$0xf]
                %219 = vst [vmem:[%s197 + $0x28] sm:$0xf] %v218
                %v220 = vld [vmem:[%s196 + $0x58] sm:$0xf]
                %221 = vst [vmem:[%s197 + $0x2c] sm:$0xf] %v220
                %v222 = vld [vmem:[%s196 + $0x60] sm:$0xf]
                %223 = vst [vmem:[%s197 + $0x30] sm:$0xf] %v222
                %v224 = vld [vmem:[%s196 + $0x68] sm:$0xf]
                %225 = vst [vmem:[%s197 + $0x34] sm:$0xf] %v224
                %v226 = vld [vmem:[%s196 + $0x70] sm:$0xf]
                %227 = vst [vmem:[%s197 + $0x38] sm:$0xf] %v226
                %v228 = vld [vmem:[%s196 + $0x78] sm:$0xf]
                %229 = vst [vmem:[%s197 + $0x3c] sm:$0xf] %v228
              $region41: #{model_forward.4} parent=35 // loop_footer
                %s195 = sadd.s32 1, %s191
              $region42: #{model_forward.4} parent=35 // loop_footer_branch
                %190 = sbr.rel target = $region38
              $region43: #{model_forward.4} parent=35 // loop_exit
                _
            $region36: #{model_forward.4} parent=27 // pred_fallthru
              _
          $region28: #{model_forward.4} parent=23 // pred_fallthru
            _
          %281 = vnop
        $region24: #{model_forward.4} parent=19 // pred_fallthru
          _
        // Predicated region
        $region62: #{model_forward.4} parent=19 // pred_check
          %p282 = pneg %p70
        $region63: #{model_forward.4} parent=19 // pred_check_branch
          %284 = sbr.rel (%p282) target = $region65
        $region64: #{model_forward.4} parent=19 // pred_region
          %s285 = smul.u32 16, %s18
          %p286 = scmp.lt.s32.totalorder %s285, 31
          %s287 = scalar_select %p286, %s285, 31
          %s288 = smul.addr %s287, 4
          %s289 = scalar_lea.vmem %s1, %s288
          %s290 = smul.u32 16, %s18
        $region65: #{model_forward.4} parent=19 // pred_fallthru
          _
        // Predicated region
        $region66: #{model_forward.4} parent=19 // pred_check
          %p291 = pneg %p96
        $region67: #{model_forward.4} parent=19 // pred_check_branch
          %293 = sbr.rel (%p291) target = $region69
        $region68: #{model_forward.4} parent=19 // pred_region
          %s294 = smul.u32 16, %s17
          %p295 = scmp.lt.s32.totalorder %s294, 31
          %s296 = scalar_select %p295, %s294, 31
          %s297 = smul.addr %s296, 8
          %s298 = scalar_lea.vmem %s2, %s297
          %s299 = smul.u32 16, %s17
        $region69: #{model_forward.4} parent=19 // pred_fallthru
          _
      $region20: #{model_forward.4} parent=5 // pred_fallthru
        _
      %p300 = scmp.le.s32.totalorder 1, %s10
      %p301 = scmp.lt.s32.totalorder %s10, 5
      %p302 = pnand %p300, %p301
      %p303 = pneg %p302
      // Predicated region
      $region70: #{model_forward.4} parent=5 // pred_check
        _
      $region71: #{model_forward.4} parent=5 // pred_check_branch
        %305 = sbr.rel (%p302) target = $region73
      $region72: #{model_forward.4} parent=5 // pred_region
        %s306 = ssub.s32 %s10, 1
        %s307 = sand.u32 %s37, 1
        %s308 = sand.u32 %s37, 1
        %s309 = smul.addr %s308, 64
        %s310 = scalar_lea.vmem [#allocation3], %s309
        // Predicated region
        $region74: #{model_forward.4} parent=72 // pred_check
          %p311 = pneg %p50
        $region75: #{model_forward.4} parent=72 // pred_check_branch
          %313 = sbr.rel (%p311) target = $region77
        $region76: #{model_forward.4} parent=72 // pred_region
          _
        $region77: #{model_forward.4} parent=72 // pred_fallthru
          _
        %s314 = sand.u32 %s37, 1
        %s315 = sand.u32 %s37, 1
        %s316 = smul.addr %s315, 64
        %s317 = scalar_lea.vmem [#allocation3], %s316
        %p318 = pneg %p50
        %p319 = pneg %p47
        %s320 = smul.u32 16, %s20
        %p321 = scmp.lt.s32.totalorder %s320, 31
        %s322 = scalar_select %p321, %s320, 31
        %s323 = smul.addr %s322, 4
        %s324 = scalar_lea.vmem %s1, %s323
        %p325 = pneg %p76
        %p326 = pneg %p73
        %s327 = smul.u32 16, %s19
        %p328 = scmp.lt.s32.totalorder %s327, 31
        %s329 = scalar_select %p328, %s327, 31
        %s330 = smul.addr %s329, 8
        %s331 = scalar_lea.vmem %s2, %s330
        %p332 = pneg %p102
        %p333 = pneg %p99
        %p334 = pneg %p123
        %p335 = pneg %p120
        %p336 = pneg %p149
        %p337 = pneg %p146
        %s338 = smul.u32 16, %s19
        %p339 = scmp.lt.s32.totalorder %s338, 31
        %s340 = scalar_select %p339, %s338, 31
        %s341 = smul.addr %s340, 8
        %s342 = scalar_lea.vmem %s4, %s341
        %s343 = smul.u32 16, %s19
        %s344 = smul.u32 16, %s20
        %p345 = scmp.lt.s32.totalorder %s344, 31
        %s346 = scalar_select %p345, %s344, 31
        %s347 = smul.addr %s346, 4
        %s348 = scalar_lea.vmem %s1, %s347
        %s349 = smul.u32 16, %s20
        %s350 = smul.u32 16, %s19
        %p351 = scmp.lt.s32.totalorder %s350, 31
        %s352 = scalar_select %p351, %s350, 31
        %s353 = smul.addr %s352, 8
        %s354 = scalar_lea.vmem %s2, %s353
        %s355 = smul.u32 16, %s19
        %s356 = smul.u32 16, %s19
        %p357 = scmp.lt.s32.totalorder %s356, 31
        %s358 = scalar_select %p357, %s356, 31
        %s359 = smul.addr %s358, 8
        %s360 = scalar_lea.vmem %s4, %s359
        %s361 = smul.u32 16, %s19
        %p363 = scmp.eq.s32.totalorder %s20, 0
        // Predicated region
        $region78: #{model_forward.4} parent=72 // pred_check
          %p364 = pneg %p363
        $region79: #{model_forward.4} parent=72 // pred_check_branch
          %366 = sbr.rel (%p364) target = $region81
        $region80: #{model_forward.4} parent=72 // pred_region
          %vm367 = vcmask 80896
          %368 = vst.msk [vmem:[#allocation2] sm:$0xff] %vm367, 0.0
          %369 = vst.msk [vmem:[#allocation2 + $0x8] sm:$0xff] %vm367, 0.0
          %370 = vst.msk [vmem:[#allocation2 + $0x10] sm:$0xff] %vm367, 0.0
          %371 = vst.msk [vmem:[#allocation2 + $0x18] sm:$0xff] %vm367, 0.0
          %372 = vst.msk [vmem:[#allocation2 + $0x20] sm:$0xff] %vm367, 0.0
          %373 = vst.msk [vmem:[#allocation2 + $0x28] sm:$0xff] %vm367, 0.0
          %374 = vst.msk [vmem:[#allocation2 + $0x30] sm:$0xff] %vm367, 0.0
          %375 = vst.msk [vmem:[#allocation2 + $0x38] sm:$0xff] %vm367, 0.0
          %376 = vst.msk [vmem:[#allocation2 + $0x40] sm:$0xff] %vm367, 0.0
          %377 = vst.msk [vmem:[#allocation2 + $0x48] sm:$0xff] %vm367, 0.0
          %378 = vst.msk [vmem:[#allocation2 + $0x50] sm:$0xff] %vm367, 0.0
          %379 = vst.msk [vmem:[#allocation2 + $0x58] sm:$0xff] %vm367, 0.0
          %380 = vst.msk [vmem:[#allocation2 + $0x60] sm:$0xff] %vm367, 0.0
          %381 = vst.msk [vmem:[#allocation2 + $0x68] sm:$0xff] %vm367, 0.0
          %382 = vst.msk [vmem:[#allocation2 + $0x70] sm:$0xff] %vm367, 0.0
          %383 = vst.msk [vmem:[#allocation2 + $0x78] sm:$0xff] %vm367, 0.0
        $region81: #{model_forward.4} parent=72 // pred_fallthru
          _
        %v384 = vld [vmem:[#allocation2] sm:$0xff]
        %v385 = vld [vmem:[#allocation2 + $0x8] sm:$0xff]
        %v386 = vld [vmem:[#allocation2 + $0x10] sm:$0xff]
        %v387 = vld [vmem:[#allocation2 + $0x18] sm:$0xff]
        %v388 = vld [vmem:[#allocation2 + $0x20] sm:$0xff]
        %v389 = vld [vmem:[#allocation2 + $0x28] sm:$0xff]
        %v390 = vld [vmem:[#allocation2 + $0x30] sm:$0xff]
        %v391 = vld [vmem:[#allocation2 + $0x38] sm:$0xff]
        %v392 = vld [vmem:[#allocation2 + $0x40] sm:$0xff]
        %v393 = vld [vmem:[#allocation2 + $0x48] sm:$0xff]
        %v394 = vld [vmem:[#allocation2 + $0x50] sm:$0xff]
        %v395 = vld [vmem:[#allocation2 + $0x58] sm:$0xff]
        %v396 = vld [vmem:[#allocation2 + $0x60] sm:$0xff]
        %v397 = vld [vmem:[#allocation2 + $0x68] sm:$0xff]
        %v398 = vld [vmem:[#allocation2 + $0x70] sm:$0xff]
        %v399 = vld [vmem:[#allocation2 + $0x78] sm:$0xff]
        %v400 = vld [vmem:[%s310] sm:$0xf]
        %v401 = vld [vmem:[%s310 + $0x4] sm:$0xf]
        %v402 = vld [vmem:[%s310 + $0x8] sm:$0xf]
        %v403 = vld [vmem:[%s310 + $0xc] sm:$0xf]
        %v404 = vld [vmem:[%s310 + $0x10] sm:$0xf]
        %v405 = vld [vmem:[%s310 + $0x14] sm:$0xf]
        %v406 = vld [vmem:[%s310 + $0x18] sm:$0xf]
        %v407 = vld [vmem:[%s310 + $0x1c] sm:$0xf]
        %v408 = vld [vmem:[%s310 + $0x20] sm:$0xf]
        %v409 = vld [vmem:[%s310 + $0x24] sm:$0xf]
        %v410 = vld [vmem:[%s310 + $0x28] sm:$0xf]
        %v411 = vld [vmem:[%s310 + $0x2c] sm:$0xf]
        %v412 = vld [vmem:[%s310 + $0x30] sm:$0xf]
        %v413 = vld [vmem:[%s310 + $0x34] sm:$0xf]
        %v414 = vld [vmem:[%s310 + $0x38] sm:$0xf]
        %v415 = vld [vmem:[%s310 + $0x3c] sm:$0xf]
        %v416 = vld [vmem:[%s348] sm:$0xf]
        %v417 = vld [vmem:[%s348 + $0x4] sm:$0xf]
        %v418 = vld [vmem:[%s348 + $0x8] sm:$0xf]
        %v419 = vld [vmem:[%s348 + $0xc] sm:$0xf]
        %v420 = vld [vmem:[%s348 + $0x10] sm:$0xf]
        %v421 = vld [vmem:[%s348 + $0x14] sm:$0xf]
        %v422 = vld [vmem:[%s348 + $0x18] sm:$0xf]
        %v423 = vld [vmem:[%s348 + $0x1c] sm:$0xf]
        %v424 = vld [vmem:[%s348 + $0x20] sm:$0xf]
        %v425 = vld [vmem:[%s348 + $0x24] sm:$0xf]
        %v426 = vld [vmem:[%s348 + $0x28] sm:$0xf]
        %v427 = vld [vmem:[%s348 + $0x2c] sm:$0xf]
        %v428 = vld [vmem:[%s348 + $0x30] sm:$0xf]
        %v429 = vld [vmem:[%s348 + $0x34] sm:$0xf]
        %v430 = vld [vmem:[%s348 + $0x38] sm:$0xf]
        %v431 = vld [vmem:[%s348 + $0x3c] sm:$0xf]
        %v448 = vunpack.c.l.b16 %v400
        %v449 = vunpack.c.l.b16 %v401
        %v450 = vunpack.c.l.b16 %v402
        %v451 = vunpack.c.l.b16 %v403
        %v452 = vunpack.c.l.b16 %v404
        %v453 = vunpack.c.l.b16 %v405
        %v454 = vunpack.c.l.b16 %v406
        %v455 = vunpack.c.l.b16 %v407
        %v456 = vunpack.c.l.b16 %v408
        %v457 = vunpack.c.l.b16 %v409
        %v458 = vunpack.c.l.b16 %v410
        %v459 = vunpack.c.l.b16 %v411
        %v460 = vunpack.c.l.b16 %v412
        %v461 = vunpack.c.l.b16 %v413
        %v462 = vunpack.c.l.b16 %v414
        %v463 = vunpack.c.l.b16 %v415
        %v464 = vpack.c.b16 %v449, %v448
        %v465 = vpack.c.b16 %v451, %v450
        %v466 = vpack.c.b16 %v453, %v452
        %v467 = vpack.c.b16 %v455, %v454
        %v468 = vpack.c.b16 %v457, %v456
        %v469 = vpack.c.b16 %v459, %v458
        %v470 = vpack.c.b16 %v461, %v460
        %v471 = vpack.c.b16 %v463, %v462
        %v496 = vunpack.c.l.b16 %v416
        %v497 = vunpack.c.l.b16 %v417
        %v498 = vunpack.c.l.b16 %v418
        %v499 = vunpack.c.l.b16 %v419
        %v500 = vunpack.c.l.b16 %v420
        %v501 = vunpack.c.l.b16 %v421
        %v502 = vunpack.c.l.b16 %v422
        %v503 = vunpack.c.l.b16 %v423
        %v504 = vunpack.c.l.b16 %v424
        %v505 = vunpack.c.l.b16 %v425
        %v506 = vunpack.c.l.b16 %v426
        %v507 = vunpack.c.l.b16 %v427
        %v508 = vunpack.c.l.b16 %v428
        %v509 = vunpack.c.l.b16 %v429
        %v510 = vunpack.c.l.b16 %v430
        %v511 = vunpack.c.l.b16 %v431
        %v512 = vpack.c.b16 %v497, %v496
        %v513 = vpack.c.b16 %v499, %v498
        %v514 = vpack.c.b16 %v501, %v500
        %v515 = vpack.c.b16 %v503, %v502
        %v516 = vpack.c.b16 %v505, %v504
        %v517 = vpack.c.b16 %v507, %v506
        %v518 = vpack.c.b16 %v509, %v508
        %v519 = vpack.c.b16 %v511, %v510
        %528 = vmatprep.subr.bf16.mxu0 0
        %529 = vmatpush1.bf16.msra.mxu0 %v512
        %530 = vmatprep.subr.bf16.mxu0 0
        %531 = vmatpush1.bf16.msra.mxu0 %v513
        %532 = vmatprep.subr.bf16.mxu0 0
        %533 = vmatpush1.bf16.msra.mxu0 %v514
        %534 = vmatprep.subr.bf16.mxu0 0
        %535 = vmatpush1.bf16.msra.mxu0 %v515
        %536 = vmatprep.subr.bf16.mxu0 0
        %537 = vmatpush1.bf16.msra.mxu0 %v516
        %538 = vmatprep.subr.bf16.mxu0 0
        %539 = vmatpush1.bf16.msra.mxu0 %v517
        %540 = vmatprep.subr.bf16.mxu0 0
        %541 = vmatpush1.bf16.msra.mxu0 %v518
        %542 = vmatprep.subr.bf16.mxu0 0
        %543 = vmatpush1.bf16.msra.mxu0 %v519
        %544 = vmatprep.subr.bf16.mxu0 0
        %545 = vmatpush1.bf16.msra.mxu0 0
        %546 = vmatprep.subr.bf16.mxu0 0
        %547 = vmatpush1.bf16.msra.mxu0 0
        %548 = vmatprep.subr.bf16.mxu0 0
        %549 = vmatpush1.bf16.msra.mxu0 0
        %550 = vmatprep.subr.bf16.mxu0 0
        %551 = vmatpush1.bf16.msra.mxu0 0
        %552 = vmatprep.subr.bf16.mxu0 0
        %553 = vmatpush1.bf16.msra.mxu0 0
        %554 = vmatprep.subr.bf16.mxu0 0
        %555 = vmatpush1.bf16.msra.mxu0 0
        %556 = vmatprep.subr.bf16.mxu0 0
        %557 = vmatpush1.bf16.msra.mxu0 0
        %558 = vmatprep.subr.bf16.mxu0 0
        %559 = vmatpush1.bf16.msra.mxu0 0
        %560 = vmatprep.mubr.bf16.mxu0 0
        %561 = vmatmul.mubr.bf16.gmra.mrb[0].mxu0 %v464
        %v562 = vpop.f32.mrb[0].mxu0
        %v563 = vadd.f32 0.0, %v562
        %v564 = vpop.f32.mrb[0].mxu0
        %v565 = vpop.f32.mrb[0].mxu0
        %v566 = vadd.f32 0.0, %v565
        %v567 = vpop.f32.mrb[0].mxu0
        %568 = vmatprep.mubr.bf16.mxu0 0
        %569 = vmatmul.mubr.bf16.gmra.mrb[0].mxu0 %v465
        %v570 = vpop.f32.mrb[0].mxu0
        %v571 = vadd.f32 0.0, %v570
        %v572 = vpop.f32.mrb[0].mxu0
        %v573 = vpop.f32.mrb[0].mxu0
        %v574 = vadd.f32 0.0, %v573
        %v575 = vpop.f32.mrb[0].mxu0
        %576 = vmatprep.mubr.bf16.mxu0 0
        %577 = vmatmul.mubr.bf16.gmra.mrb[0].mxu0 %v466
        %v578 = vpop.f32.mrb[0].mxu0
        %v579 = vadd.f32 0.0, %v578
        %v580 = vpop.f32.mrb[0].mxu0
        %v581 = vpop.f32.mrb[0].mxu0
        %v582 = vadd.f32 0.0, %v581
        %v583 = vpop.f32.mrb[0].mxu0
        %584 = vmatprep.mubr.bf16.mxu0 0
        %585 = vmatmul.mubr.bf16.gmra.mrb[0].mxu0 %v467
        %v586 = vpop.f32.mrb[0].mxu0
        %v587 = vadd.f32 0.0, %v586
        %v588 = vpop.f32.mrb[0].mxu0
        %v589 = vpop.f32.mrb[0].mxu0
        %v590 = vadd.f32 0.0, %v589
        %v591 = vpop.f32.mrb[0].mxu0
        %592 = vmatprep.mubr.bf16.mxu0 0
        %593 = vmatmul.mubr.bf16.gmra.mrb[0].mxu0 %v468
        %v594 = vpop.f32.mrb[0].mxu0
        %v595 = vadd.f32 0.0, %v594
        %v596 = vpop.f32.mrb[0].mxu0
        %v597 = vpop.f32.mrb[0].mxu0
        %v598 = vadd.f32 0.0, %v597
        %v599 = vpop.f32.mrb[0].mxu0
        %600 = vmatprep.mubr.bf16.mxu0 0
        %601 = vmatmul.mubr.bf16.gmra.mrb[0].mxu0 %v469
        %v602 = vpop.f32.mrb[0].mxu0
        %v603 = vadd.f32 0.0, %v602
        %v604 = vpop.f32.mrb[0].mxu0
        %v605 = vpop.f32.mrb[0].mxu0
        %v606 = vadd.f32 0.0, %v605
        %v607 = vpop.f32.mrb[0].mxu0
        %608 = vmatprep.mubr.bf16.mxu0 0
        %609 = vmatmul.mubr.bf16.gmra.mrb[0].mxu0 %v470
        %v610 = vpop.f32.mrb[0].mxu0
        %v611 = vadd.f32 0.0, %v610
        %v612 = vpop.f32.mrb[0].mxu0
        %v613 = vpop.f32.mrb[0].mxu0
        %v614 = vadd.f32 0.0, %v613
        %v615 = vpop.f32.mrb[0].mxu0
        %616 = vmatprep.mubr.bf16.mxu0 0
        %617 = vmatmul.mubr.bf16.gmra.mrb[0].mxu0 %v471
        %v618 = vpop.f32.mrb[0].mxu0
        %v619 = vadd.f32 0.0, %v618
        %v620 = vpop.f32.mrb[0].mxu0
        %v621 = vpop.f32.mrb[0].mxu0
        %v622 = vadd.f32 0.0, %v621
        %v623 = vpop.f32.mrb[0].mxu0
        %624 = vdwg.mxu0
        %v625 = vadd.f32 %v384, %v563
        %v626 = vadd.f32 %v385, %v566
        %v627 = vadd.f32 %v386, %v571
        %v628 = vadd.f32 %v387, %v574
        %v629 = vadd.f32 %v388, %v579
        %v630 = vadd.f32 %v389, %v582
        %v631 = vadd.f32 %v390, %v587
        %v632 = vadd.f32 %v391, %v590
        %v633 = vadd.f32 %v392, %v595
        %v634 = vadd.f32 %v393, %v598
        %v635 = vadd.f32 %v394, %v603
        %v636 = vadd.f32 %v395, %v606
        %v637 = vadd.f32 %v396, %v611
        %v638 = vadd.f32 %v397, %v614
        %v639 = vadd.f32 %v398, %v619
        %v640 = vadd.f32 %v399, %v622
        %vm641 = vcmask 80896
        %642 = vst.msk [vmem:[#allocation2] sm:$0xff] %vm641, %v625
        %643 = vst.msk [vmem:[#allocation2 + $0x8] sm:$0xff] %vm641, %v626
        %644 = vst.msk [vmem:[#allocation2 + $0x10] sm:$0xff] %vm641, %v627
        %645 = vst.msk [vmem:[#allocation2 + $0x18] sm:$0xff] %vm641, %v628
        %646 = vst.msk [vmem:[#allocation2 + $0x20] sm:$0xff] %vm641, %v629
        %647 = vst.msk [vmem:[#allocation2 + $0x28] sm:$0xff] %vm641, %v630
        %648 = vst.msk [vmem:[#allocation2 + $0x30] sm:$0xff] %vm641, %v631
        %649 = vst.msk [vmem:[#allocation2 + $0x38] sm:$0xff] %vm641, %v632
        %650 = vst.msk [vmem:[#allocation2 + $0x40] sm:$0xff] %vm641, %v633
        %651 = vst.msk [vmem:[#allocation2 + $0x48] sm:$0xff] %vm641, %v634
        %652 = vst.msk [vmem:[#allocation2 + $0x50] sm:$0xff] %vm641, %v635
        %653 = vst.msk [vmem:[#allocation2 + $0x58] sm:$0xff] %vm641, %v636
        %654 = vst.msk [vmem:[#allocation2 + $0x60] sm:$0xff] %vm641, %v637
        %655 = vst.msk [vmem:[#allocation2 + $0x68] sm:$0xff] %vm641, %v638
        %656 = vst.msk [vmem:[#allocation2 + $0x70] sm:$0xff] %vm641, %v639
        %657 = vst.msk [vmem:[#allocation2 + $0x78] sm:$0xff] %vm641, %v640
        %p658 = scmp.eq.s32.totalorder %s20, 1
        // Predicated region
        $region82: #{model_forward.4} parent=72 // pred_check
          %p659 = pneg %p658
        $region83: #{model_forward.4} parent=72 // pred_check_branch
          %661 = sbr.rel (%p659) target = $region85
        $region84: #{model_forward.4} parent=72 // pred_region
          %v662 = vld [vmem:[%s354] sm:$0xff]
          %v663 = vld [vmem:[%s354 + $0x8] sm:$0xff]
          %v664 = vld [vmem:[%s354 + $0x10] sm:$0xff]
          %v665 = vld [vmem:[%s354 + $0x18] sm:$0xff]
          %v666 = vld [vmem:[%s354 + $0x20] sm:$0xff]
          %v667 = vld [vmem:[%s354 + $0x28] sm:$0xff]
          %v668 = vld [vmem:[%s354 + $0x30] sm:$0xff]
          %v669 = vld [vmem:[%s354 + $0x38] sm:$0xff]
          %v670 = vld [vmem:[%s354 + $0x40] sm:$0xff]
          %v671 = vld [vmem:[%s354 + $0x48] sm:$0xff]
          %v672 = vld [vmem:[%s354 + $0x50] sm:$0xff]
          %v673 = vld [vmem:[%s354 + $0x58] sm:$0xff]
          %v674 = vld [vmem:[%s354 + $0x60] sm:$0xff]
          %v675 = vld [vmem:[%s354 + $0x68] sm:$0xff]
          %v676 = vld [vmem:[%s354 + $0x70] sm:$0xff]
          %v677 = vld [vmem:[%s354 + $0x78] sm:$0xff]
          %v678 = vld [vmem:[#allocation2] sm:$0xff]
          %v679 = vld [vmem:[#allocation2 + $0x8] sm:$0xff]
          %v680 = vld [vmem:[#allocation2 + $0x10] sm:$0xff]
          %v681 = vld [vmem:[#allocation2 + $0x18] sm:$0xff]
          %v682 = vld [vmem:[#allocation2 + $0x20] sm:$0xff]
          %v683 = vld [vmem:[#allocation2 + $0x28] sm:$0xff]
          %v684 = vld [vmem:[#allocation2 + $0x30] sm:$0xff]
          %v685 = vld [vmem:[#allocation2 + $0x38] sm:$0xff]
          %v686 = vld [vmem:[#allocation2 + $0x40] sm:$0xff]
          %v687 = vld [vmem:[#allocation2 + $0x48] sm:$0xff]
          %v688 = vld [vmem:[#allocation2 + $0x50] sm:$0xff]
          %v689 = vld [vmem:[#allocation2 + $0x58] sm:$0xff]
          %v690 = vld [vmem:[#allocation2 + $0x60] sm:$0xff]
          %v691 = vld [vmem:[#allocation2 + $0x68] sm:$0xff]
          %v692 = vld [vmem:[#allocation2 + $0x70] sm:$0xff]
          %v693 = vld [vmem:[#allocation2 + $0x78] sm:$0xff]
          %695 = vset.pattern.permute.xlu0 0
          %696 = vperm.xlu0 %695, %v662
          %v697 = vpop.permute.xlu0 %696
          %700 = vset.pattern.permute.xlu0 0
          %701 = vperm.xlu0 %700, %v663
          %v702 = vpop.permute.xlu0 %701
          %705 = vset.pattern.permute.xlu0 0
          %706 = vperm.xlu0 %705, %v664
          %v707 = vpop.permute.xlu0 %706
          %710 = vset.pattern.permute.xlu0 0
          %711 = vperm.xlu0 %710, %v665
          %v712 = vpop.permute.xlu0 %711
          %715 = vset.pattern.permute.xlu0 0
          %716 = vperm.xlu0 %715, %v666
          %v717 = vpop.permute.xlu0 %716
          %720 = vset.pattern.permute.xlu0 0
          %721 = vperm.xlu0 %720, %v667
          %v722 = vpop.permute.xlu0 %721
          %725 = vset.pattern.permute.xlu0 0
          %726 = vperm.xlu0 %725, %v668
          %v727 = vpop.permute.xlu0 %726
          %730 = vset.pattern.permute.xlu0 0
          %731 = vperm.xlu0 %730, %v669
          %v732 = vpop.permute.xlu0 %731
          %735 = vset.pattern.permute.xlu0 0
          %736 = vperm.xlu0 %735, %v670
          %v737 = vpop.permute.xlu0 %736
          %740 = vset.pattern.permute.xlu0 0
          %741 = vperm.xlu0 %740, %v671
          %v742 = vpop.permute.xlu0 %741
          %745 = vset.pattern.permute.xlu0 0
          %746 = vperm.xlu0 %745, %v672
          %v747 = vpop.permute.xlu0 %746
          %750 = vset.pattern.permute.xlu0 0
          %751 = vperm.xlu0 %750, %v673
          %v752 = vpop.permute.xlu0 %751
          %755 = vset.pattern.permute.xlu0 0
          %756 = vperm.xlu0 %755, %v674
          %v757 = vpop.permute.xlu0 %756
          %760 = vset.pattern.permute.xlu0 0
          %761 = vperm.xlu0 %760, %v675
          %v762 = vpop.permute.xlu0 %761
          %765 = vset.pattern.permute.xlu0 0
          %766 = vperm.xlu0 %765, %v676
          %v767 = vpop.permute.xlu0 %766
          %770 = vset.pattern.permute.xlu0 0
          %771 = vperm.xlu0 %770, %v677
          %v772 = vpop.permute.xlu0 %771
          %v774 = vmul.f32 %v697, %v678
          %v775 = vmul.f32 %v702, %v679
          %v776 = vmul.f32 %v707, %v680
          %v777 = vmul.f32 %v712, %v681
          %v778 = vmul.f32 %v717, %v682
          %v779 = vmul.f32 %v722, %v683
          %v780 = vmul.f32 %v727, %v684
          %v781 = vmul.f32 %v732, %v685
          %v782 = vmul.f32 %v737, %v686
          %v783 = vmul.f32 %v742, %v687
          %v784 = vmul.f32 %v747, %v688
          %v785 = vmul.f32 %v752, %v689
          %v786 = vmul.f32 %v757, %v690
          %v787 = vmul.f32 %v762, %v691
          %v788 = vmul.f32 %v767, %v692
          %v789 = vmul.f32 %v772, %v693
          %v790 = vld [vmem:[%s3] sm:$0x1]
          %v792 = vlaneseq
          %v793 = vshrl.u32 %v792, 7
          %v794 = vsub.s32 0, %v793
          %v795 = vrot.slane %v790, %v794
          %v797 = vadd.f32 %v774, %v795
          %v798 = vadd.f32 %v775, %v795
          %v799 = vadd.f32 %v776, %v795
          %v800 = vadd.f32 %v777, %v795
          %v801 = vadd.f32 %v778, %v795
          %v802 = vadd.f32 %v779, %v795
          %v803 = vadd.f32 %v780, %v795
          %v804 = vadd.f32 %v781, %v795
          %v805 = vadd.f32 %v782, %v795
          %v806 = vadd.f32 %v783, %v795
          %v807 = vadd.f32 %v784, %v795
          %v808 = vadd.f32 %v785, %v795
          %v809 = vadd.f32 %v786, %v795
          %v810 = vadd.f32 %v787, %v795
          %v811 = vadd.f32 %v788, %v795
          %v812 = vadd.f32 %v789, %v795
          %v813 = vtanh.pop %v797
          %v814 = vtanh.pop %v798
          %v815 = vtanh.pop %v799
          %v816 = vtanh.pop %v800
          %v817 = vtanh.pop %v801
          %v818 = vtanh.pop %v802
          %v819 = vtanh.pop %v803
          %v820 = vtanh.pop %v804
          %v821 = vtanh.pop %v805
          %v822 = vtanh.pop %v806
          %v823 = vtanh.pop %v807
          %v824 = vtanh.pop %v808
          %v825 = vtanh.pop %v809
          %v826 = vtanh.pop %v810
          %v827 = vtanh.pop %v811
          %v828 = vtanh.pop %v812
          %829 = vst.msk [vmem:[%s360] sm:$0xff] %vm641, %v813
          %830 = vst.msk [vmem:[%s360 + $0x8] sm:$0xff] %vm641, %v814
          %831 = vst.msk [vmem:[%s360 + $0x10] sm:$0xff] %vm641, %v815
          %832 = vst.msk [vmem:[%s360 + $0x18] sm:$0xff] %vm641, %v816
          %833 = vst.msk [vmem:[%s360 + $0x20] sm:$0xff] %vm641, %v817
          %834 = vst.msk [vmem:[%s360 + $0x28] sm:$0xff] %vm641, %v818
          %835 = vst.msk [vmem:[%s360 + $0x30] sm:$0xff] %vm641, %v819
          %836 = vst.msk [vmem:[%s360 + $0x38] sm:$0xff] %vm641, %v820
          %837 = vst.msk [vmem:[%s360 + $0x40] sm:$0xff] %vm641, %v821
          %838 = vst.msk [vmem:[%s360 + $0x48] sm:$0xff] %vm641, %v822
          %839 = vst.msk [vmem:[%s360 + $0x50] sm:$0xff] %vm641, %v823
          %840 = vst.msk [vmem:[%s360 + $0x58] sm:$0xff] %vm641, %v824
          %841 = vst.msk [vmem:[%s360 + $0x60] sm:$0xff] %vm641, %v825
          %842 = vst.msk [vmem:[%s360 + $0x68] sm:$0xff] %vm641, %v826
          %843 = vst.msk [vmem:[%s360 + $0x70] sm:$0xff] %vm641, %v827
          %844 = vst.msk [vmem:[%s360 + $0x78] sm:$0xff] %vm641, %v828
        $region85: #{model_forward.4} parent=72 // pred_fallthru
          _
        %s845 = smul.u32 16, %s19
        %p846 = scmp.lt.s32.totalorder %s845, 31
        %s847 = scalar_select %p846, %s845, 31
        %s848 = smul.addr %s847, 8
        %s849 = scalar_lea.vmem %s4, %s848
        // Predicated region
        $region86: #{model_forward.4} parent=72 // pred_check
          %p850 = pneg %p146
        $region87: #{model_forward.4} parent=72 // pred_check_branch
          %852 = sbr.rel (%p850) target = $region89
        $region88: #{model_forward.4} parent=72 // pred_region
          %s853 = smul.u32 16, %s19
        $region89: #{model_forward.4} parent=72 // pred_fallthru
          _
      $region73: #{model_forward.4} parent=5 // pred_fallthru
        _
      %p854 = scmp.le.s32.totalorder 2, %s10
      // Predicated region
      $region90: #{model_forward.4} parent=5 // pred_check
        %p855 = pneg %p854
      $region91: #{model_forward.4} parent=5 // pred_check_branch
        %857 = sbr.rel (%p855) target = $region93
      $region92: #{model_forward.4} parent=5 // pred_region
        %s858 = ssub.s32 %s10, 2
        // Predicated region
        $region94: #{model_forward.4} parent=92 // pred_check
          %p859 = pneg %p152
        $region95: #{model_forward.4} parent=92 // pred_check_branch
          %861 = sbr.rel (%p859) target = $region97
        $region96: #{model_forward.4} parent=92 // pred_region
          %s862 = smul.u32 16, %s21
          %p863 = scmp.lt.s32.totalorder %s862, 31
          %s864 = scalar_select %p863, %s862, 31
          %s865 = smul.addr %s864, 8
          %s866 = scalar_lea.vmem %s4, %s865
        $region97: #{model_forward.4} parent=92 // pred_fallthru
          _
      $region93: #{model_forward.4} parent=5 // pred_fallthru
        _
    $region6: #{model_forward.4} parent=1 // loop_footer
      %s14 = sadd.s32 1, %s10
    $region7: #{model_forward.4} parent=1 // loop_footer_branch
      %9 = sbr.rel target = $region3
    $region8: #{model_forward.4} parent=1 // loop_exit
      _

// kernel: model_forward.3
$region0: #{model_forward.3}
  #allocation0 [shape = 'u32[]', space=smem, size = 0x4, offset = 0x4, fixed_abs, tag = 'smem constant byte address 0x4 - core index']
  #allocation1 [shape = 'u32[144,128]{1,0:T(1,128)}', space=vmem, size = 0x12000, scoped, tag = 'internal scratch']
  %s0 = inlined_call_operand.vmem [shape: f32[256,5], index: 0, kind: input, shape index: {}]
  %s1 = inlined_call_operand.vmem [shape: f32[256,1], index: 1, kind: input, shape index: {}]
  %s2 = inlined_call_operand.vmem [shape: f32[5,10], index: 2, kind: input, shape index: {}]
  %s3 = inlined_call_operand.vmem [shape: f32[1,10], index: 3, kind: input, shape index: {}]
  %s4 = inlined_call_operand.vmem [shape: f32[10,10], index: 4, kind: input, shape index: {}]
  %s5 = inlined_call_operand.vmem [shape: bf16[256,10], index: 5, kind: output, shape index: {}]
  %s6 = sld [smem:[#allocation0]]
  $region53: #{model_forward.3} parent=0
    _
  %s8 = ssub.s32 1, %s6
  %s9 = scalar_select 0, %s8, %s6
  loop: start=0, step=1, limit=4
  $region2: #{model_forward.3} parent=0 // loop_pre_header
    _
  $region3: #{model_forward.3} parent=0 // loop_header
    %s11 = sphi 0, %s15
    %p12 = scmp.ge.s32.totalorder %s11, 4
    %s21 = sphi 0, %s23
    %s24 = sphi 0, %s21
    %s25 = sphi 0, %s24
    %s41 = sphi 0, %s25
    %s47 = sphi 0, %s49
    %s50 = sphi 0, %s47
    %s51 = sphi 0, %s50
    %s67 = sphi 0, %s51
    %s71 = sphi 0, %s71
    %s73 = sphi 0, %s71
    %s74 = sphi 0, %s73
    %s88 = sphi 0, %s74
    %s92 = sphi 0, %s92
    %s94 = sphi 0, %s92
    %s95 = sphi 0, %s94
    %s109 = sphi 0, %s95
    %s113 = sphi 0, %s113
    %s115 = sphi 0, %s113
    %s116 = sphi 0, %s115
    %s130 = sphi 0, %s116
    %s136 = sphi 0, %s138
    %s139 = sphi 0, %s136
    %s140 = sphi 0, %s139
    %s156 = sphi 0, %s140
  $region4: #{model_forward.3} parent=0 // loop_header_branch
    %14 = sbr.rel (%p12) target = $region8
  $region5: #{model_forward.3} parent=0 // loop_body
    %s16 = ssub.s32 %s11, 1
    %s17 = ssub.s32 %s11, 2
    %s18 = sadd.s32 %s11, 1
    %s19 = ssub.s32 %s11, %s18
    %p20 = scmp.eq.s32.totalorder %s19, 0
    %s22 = sadd.s32 %s21, 1
    %s23 = scalar_select %p20, %s21, %s22
    %p26 = pneg %p20
    %p27 = scmp.eq.s32.totalorder %s11, 1
    %p28 = por %p26, %p27
    %p29 = scmp.ne.s32.totalorder %s21, %s24
    %p30 = scmp.eq.s32.totalorder %s11, 0
    %p31 = por %p29, %p30
    %p32 = scmp.ne.s32.totalorder %s21, %s24
    %p33 = scmp.eq.s32.totalorder %s16, 1
    %p34 = por %p32, %p33
    %p35 = scmp.ne.s32.totalorder %s24, %s25
    %p36 = scmp.eq.s32.totalorder %s16, 0
    %p37 = por %p35, %p36
    %p38 = scmp.ne.s32.totalorder %s24, %s25
    %p39 = scmp.eq.s32.totalorder %s17, 1
    %p40 = por %p38, %p39
    %p42 = scmp.ne.s32.totalorder %s25, %s41
    %p43 = scmp.eq.s32.totalorder %s17, 0
    %p44 = por %p42, %p43
    %s45 = ssub.s32 %s11, %s18
    %p46 = scmp.eq.s32.totalorder %s45, 0
    %s48 = sadd.s32 %s47, 1
    %s49 = scalar_select %p46, %s47, %s48
    %p52 = pneg %p46
    %p53 = scmp.eq.s32.totalorder %s11, 1
    %p54 = por %p52, %p53
    %p55 = scmp.ne.s32.totalorder %s47, %s50
    %p56 = scmp.eq.s32.totalorder %s11, 0
    %p57 = por %p55, %p56
    %p58 = scmp.ne.s32.totalorder %s47, %s50
    %p59 = scmp.eq.s32.totalorder %s16, 1
    %p60 = por %p58, %p59
    %p61 = scmp.ne.s32.totalorder %s50, %s51
    %p62 = scmp.eq.s32.totalorder %s16, 0
    %p63 = por %p61, %p62
    %p64 = scmp.ne.s32.totalorder %s50, %s51
    %p65 = scmp.eq.s32.totalorder %s17, 1
    %p66 = por %p64, %p65
    %p68 = scmp.ne.s32.totalorder %s51, %s67
    %p69 = scmp.eq.s32.totalorder %s17, 0
    %p70 = por %p68, %p69
    %s72 = sadd.s32 %s71, 1
    %p75 = scmp.eq.s32.totalorder %s11, 1
    %p76 = scmp.ne.s32.totalorder %s71, %s73
    %p77 = scmp.eq.s32.totalorder %s11, 0
    %p78 = por %p76, %p77
    %p79 = scmp.ne.s32.totalorder %s71, %s73
    %p80 = scmp.eq.s32.totalorder %s16, 1
    %p81 = por %p79, %p80
    %p82 = scmp.ne.s32.totalorder %s73, %s74
    %p83 = scmp.eq.s32.totalorder %s16, 0
    %p84 = por %p82, %p83
    %p85 = scmp.ne.s32.totalorder %s73, %s74
    %p86 = scmp.eq.s32.totalorder %s17, 1
    %p87 = por %p85, %p86
    %p89 = scmp.ne.s32.totalorder %s74, %s88
    %p90 = scmp.eq.s32.totalorder %s17, 0
    %p91 = por %p89, %p90
    %s93 = sadd.s32 %s92, 1
    %p96 = scmp.eq.s32.totalorder %s11, 1
    %p97 = scmp.ne.s32.totalorder %s92, %s94
    %p98 = scmp.eq.s32.totalorder %s11, 0
    %p99 = por %p97, %p98
    %p100 = scmp.ne.s32.totalorder %s92, %s94
    %p101 = scmp.eq.s32.totalorder %s16, 1
    %p102 = por %p100, %p101
    %p103 = scmp.ne.s32.totalorder %s94, %s95
    %p104 = scmp.eq.s32.totalorder %s16, 0
    %p105 = por %p103, %p104
    %p106 = scmp.ne.s32.totalorder %s94, %s95
    %p107 = scmp.eq.s32.totalorder %s17, 1
    %p108 = por %p106, %p107
    %p110 = scmp.ne.s32.totalorder %s95, %s109
    %p111 = scmp.eq.s32.totalorder %s17, 0
    %p112 = por %p110, %p111
    %s114 = sadd.s32 %s113, 1
    %p117 = scmp.eq.s32.totalorder %s11, 1
    %p118 = scmp.ne.s32.totalorder %s113, %s115
    %p119 = scmp.eq.s32.totalorder %s11, 0
    %p120 = por %p118, %p119
    %p121 = scmp.ne.s32.totalorder %s113, %s115
    %p122 = scmp.eq.s32.totalorder %s16, 1
    %p123 = por %p121, %p122
    %p124 = scmp.ne.s32.totalorder %s115, %s116
    %p125 = scmp.eq.s32.totalorder %s16, 0
    %p126 = por %p124, %p125
    %p127 = scmp.ne.s32.totalorder %s115, %s116
    %p128 = scmp.eq.s32.totalorder %s17, 1
    %p129 = por %p127, %p128
    %p131 = scmp.ne.s32.totalorder %s116, %s130
    %p132 = scmp.eq.s32.totalorder %s17, 0
    %p133 = por %p131, %p132
    %s134 = ssub.s32 %s11, %s18
    %p135 = scmp.eq.s32.totalorder %s134, 0
    %s137 = sadd.s32 %s136, 1
    %s138 = scalar_select %p135, %s136, %s137
    %p141 = pneg %p135
    %p142 = scmp.eq.s32.totalorder %s11, 1
    %p143 = por %p141, %p142
    %p144 = scmp.ne.s32.totalorder %s136, %s139
    %p145 = scmp.eq.s32.totalorder %s11, 0
    %p146 = por %p144, %p145
    %p147 = scmp.ne.s32.totalorder %s136, %s139
    %p148 = scmp.eq.s32.totalorder %s16, 1
    %p149 = por %p147, %p148
    %p150 = scmp.ne.s32.totalorder %s139, %s140
    %p151 = scmp.eq.s32.totalorder %s16, 0
    %p152 = por %p150, %p151
    %p153 = scmp.ne.s32.totalorder %s139, %s140
    %p154 = scmp.eq.s32.totalorder %s17, 1
    %p155 = por %p153, %p154
    %p157 = scmp.ne.s32.totalorder %s140, %s156
    %p158 = scmp.eq.s32.totalorder %s17, 0
    %p159 = por %p157, %p158
    %p160 = scmp.le.s32.totalorder 1, %s11
    %p161 = scmp.lt.s32.totalorder %s11, 3
    %p162 = pnand %p160, %p161
    %p163 = pneg %p162
    // Predicated region
    $region9: #{model_forward.3} parent=5 // pred_check
      _
    $region10: #{model_forward.3} parent=5 // pred_check_branch
      %165 = sbr.rel (%p162) target = $region12
    $region11: #{model_forward.3} parent=5 // pred_region
      %s166 = ssub.s32 %s11, 1
      // Predicated region
      $region13: #{model_forward.3} parent=11 // pred_check
        %p167 = pneg %p84
      $region14: #{model_forward.3} parent=11 // pred_check_branch
        %169 = sbr.rel (%p167) target = $region16
      $region15: #{model_forward.3} parent=11 // pred_region
        _
      $region16: #{model_forward.3} parent=11 // pred_fallthru
        _
      // Predicated region
      $region17: #{model_forward.3} parent=11 // pred_check
        %p170 = pneg %p105
      $region18: #{model_forward.3} parent=11 // pred_check_branch
        %172 = sbr.rel (%p170) target = $region20
      $region19: #{model_forward.3} parent=11 // pred_region
        _
      $region20: #{model_forward.3} parent=11 // pred_fallthru
        _
      // Predicated region
      $region21: #{model_forward.3} parent=11 // pred_check
        %p173 = pneg %p126
      $region22: #{model_forward.3} parent=11 // pred_check_branch
        %175 = sbr.rel (%p173) target = $region24
      $region23: #{model_forward.3} parent=11 // pred_region
        _
      $region24: #{model_forward.3} parent=11 // pred_fallthru
        _
    $region12: #{model_forward.3} parent=5 // pred_fallthru
      _
    %p176 = scmp.lt.s32.totalorder %s11, 2
    // Predicated region
    $region25: #{model_forward.3} parent=5 // pred_check
      %p177 = pneg %p176
    $region26: #{model_forward.3} parent=5 // pred_check_branch
      %179 = sbr.rel (%p177) target = $region28
    $region27: #{model_forward.3} parent=5 // pred_region
      // Predicated region
      $region29: #{model_forward.3} parent=27 // pred_check
        %p180 = pneg %p31
      $region30: #{model_forward.3} parent=27 // pred_check_branch
        %182 = sbr.rel (%p180) target = $region32
      $region31: #{model_forward.3} parent=27 // pred_region
        %s183 = smul.u32 16, %s11
        %p184 = scmp.lt.s32.totalorder %s183, 31
        %s185 = scalar_select %p184, %s183, 31
        %s186 = smul.addr %s185, 8
        %s187 = scalar_lea.vmem %s0, %s186
        %s188 = smul.u32 16, %s11
      $region32: #{model_forward.3} parent=27 // pred_fallthru
        _
      // Predicated region
      $region33: #{model_forward.3} parent=27 // pred_check
        %p189 = pneg %p57
      $region34: #{model_forward.3} parent=27 // pred_check_branch
        %191 = sbr.rel (%p189) target = $region36
      $region35: #{model_forward.3} parent=27 // pred_region
        %s192 = smul.u32 16, %s11
        %p193 = scmp.lt.s32.totalorder %s192, 31
        %s194 = scalar_select %p193, %s192, 31
        %s195 = smul.addr %s194, 8
        %s196 = scalar_lea.vmem %s1, %s195
        %s197 = smul.u32 16, %s11
      $region36: #{model_forward.3} parent=27 // pred_fallthru
        _
    $region28: #{model_forward.3} parent=5 // pred_fallthru
      _
    %p198 = scmp.le.s32.totalorder 1, %s11
    %p199 = scmp.lt.s32.totalorder %s11, 3
    %p200 = pnand %p198, %p199
    %p201 = pneg %p200
    // Predicated region
    $region37: #{model_forward.3} parent=5 // pred_check
      _
    $region38: #{model_forward.3} parent=5 // pred_check_branch
      %203 = sbr.rel (%p200) target = $region40
    $region39: #{model_forward.3} parent=5 // pred_region
      %s204 = ssub.s32 %s11, 1
      %s205 = smul.u32 16, %s16
      %p206 = scmp.lt.s32.totalorder %s205, 31
      %s207 = scalar_select %p206, %s205, 31
      %s208 = smul.addr %s207, 8
      %s209 = scalar_lea.vmem %s0, %s208
      %p210 = pneg %p37
      %p211 = pneg %p34
      %s212 = smul.u32 16, %s16
      %p213 = scmp.lt.s32.totalorder %s212, 31
      %s214 = scalar_select %p213, %s212, 31
      %s215 = smul.addr %s214, 8
      %s216 = scalar_lea.vmem %s1, %s215
      %p217 = pneg %p63
      %p218 = pneg %p60
      %p219 = pneg %p84
      %p220 = pneg %p81
      %p221 = pneg %p105
      %p222 = pneg %p102
      %p223 = pneg %p126
      %p224 = pneg %p123
      %p225 = pneg %p152
      %p226 = pneg %p149
      %s227 = smul.u32 16, %s16
      %p228 = scmp.lt.s32.totalorder %s227, 31
      %s229 = scalar_select %p228, %s227, 31
      %s230 = smul.addr %s229, 4
      %s231 = scalar_lea.vmem %s5, %s230
      %s232 = smul.u32 16, %s16
      %p233 = scmp.lt.s32.totalorder %s232, 31
      %s234 = scalar_select %p233, %s232, 31
      %s235 = smul.addr %s234, 8
      %s236 = scalar_lea.vmem %s0, %s235
      %s237 = smul.u32 16, %s16
      %s238 = smul.u32 16, %s16
      %p239 = scmp.lt.s32.totalorder %s238, 31
      %s240 = scalar_select %p239, %s238, 31
      %s241 = smul.addr %s240, 8
      %s242 = scalar_lea.vmem %s1, %s241
      %s243 = smul.u32 16, %s16
      %s244 = smul.u32 16, %s16
      %p245 = scmp.lt.s32.totalorder %s244, 31
      %s246 = scalar_select %p245, %s244, 31
      %s247 = smul.addr %s246, 4
      %s248 = scalar_lea.vmem %s5, %s247
      %s249 = smul.u32 16, %s16
      %v250 = vld [vmem:[%s236] sm:$0xff]
      %v251 = vld [vmem:[%s236 + $0x8] sm:$0xff]
      %v252 = vld [vmem:[%s236 + $0x10] sm:$0xff]
      %v253 = vld [vmem:[%s236 + $0x18] sm:$0xff]
      %v254 = vld [vmem:[%s236 + $0x20] sm:$0xff]
      %v255 = vld [vmem:[%s236 + $0x28] sm:$0xff]
      %v256 = vld [vmem:[%s236 + $0x30] sm:$0xff]
      %v257 = vld [vmem:[%s236 + $0x38] sm:$0xff]
      %v258 = vld [vmem:[%s236 + $0x40] sm:$0xff]
      %v259 = vld [vmem:[%s236 + $0x48] sm:$0xff]
      %v260 = vld [vmem:[%s236 + $0x50] sm:$0xff]
      %v261 = vld [vmem:[%s236 + $0x58] sm:$0xff]
      %v262 = vld [vmem:[%s236 + $0x60] sm:$0xff]
      %v263 = vld [vmem:[%s236 + $0x68] sm:$0xff]
      %v264 = vld [vmem:[%s236 + $0x70] sm:$0xff]
      %v265 = vld [vmem:[%s236 + $0x78] sm:$0xff]
      %v266 = vld [vmem:[%s2] sm:$0x1f]
      %v267 = vld [vmem:[%s3] sm:$0x1]
      %v269 = vlaneseq
      %v270 = vshrl.u32 %v269, 7
      %v271 = vsub.s32 0, %v270
      %v272 = vrot.slane %v267, %v271
      %vm274 = vcmask 39936
      %v276 = vsel %vm274, %v250, 0
      %v279 = vsel %vm274, %v251, 0
      %v282 = vsel %vm274, %v252, 0
      %v285 = vsel %vm274, %v253, 0
      %v288 = vsel %vm274, %v254, 0
      %v291 = vsel %vm274, %v255, 0
      %v294 = vsel %vm274, %v256, 0
      %v297 = vsel %vm274, %v257, 0
      %v300 = vsel %vm274, %v258, 0
      %v303 = vsel %vm274, %v259, 0
      %v306 = vsel %vm274, %v260, 0
      %v309 = vsel %vm274, %v261, 0
      %v312 = vsel %vm274, %v262, 0
      %v315 = vsel %vm274, %v263, 0
      %v318 = vsel %vm274, %v264, 0
      %v321 = vsel %vm274, %v265, 0
      %vm323 = vcmask 1044480
      %v325 = vsel %vm323, %v266, 0
      %327 = vmatprep.subr.mxu0 0.0
      %328 = vmatpush1.msra.mxu0 %v325
      %329 = vmatprep.subr.mxu0 0.0
      %330 = vmatpush1.msra.mxu0 0.0
      %331 = vmatprep.subr.mxu0 0.0
      %332 = vmatpush1.msra.mxu0 0.0
      %333 = vmatprep.subr.mxu0 0.0
      %334 = vmatpush1.msra.mxu0 0.0
      %335 = vmatprep.subr.mxu0 0.0
      %336 = vmatpush1.msra.mxu0 0.0
      %337 = vmatprep.subr.mxu0 0.0
      %338 = vmatpush1.msra.mxu0 0.0
      %339 = vmatprep.subr.mxu0 0.0
      %340 = vmatpush1.msra.mxu0 0.0
      %341 = vmatprep.subr.mxu0 0.0
      %342 = vmatpush1.msra.mxu0 0.0
      %343 = vmatprep.subr.mxu0 0.0
      %344 = vmatpush1.msra.mxu0 0.0
      %345 = vmatprep.subr.mxu0 0.0
      %346 = vmatpush1.msra.mxu0 0.0
      %347 = vmatprep.subr.mxu0 0.0
      %348 = vmatpush1.msra.mxu0 0.0
      %349 = vmatprep.subr.mxu0 0.0
      %350 = vmatpush1.msra.mxu0 0.0
      %351 = vmatprep.subr.mxu0 0.0
      %352 = vmatpush1.msra.mxu0 0.0
      %353 = vmatprep.subr.mxu0 0.0
      %354 = vmatpush1.msra.mxu0 0.0
      %355 = vmatprep.subr.mxu0 0.0
      %356 = vmatpush1.msra.mxu0 0.0
      %357 = vmatprep.subr.mxu0 0.0
      %358 = vmatpush1.msra.mxu0 0.0
      %359 = vmatprep.subr.mxu0 0.0
      %360 = vmatpush1.msra.mxu0 0.0
      %361 = vmatprep.subr.mxu0 0.0
      %362 = vmatpush1.msra.mxu0 0.0
      %363 = vmatprep.subr.mxu0 0.0
      %364 = vmatpush1.msra.mxu0 0.0
      %365 = vmatprep.subr.mxu0 0.0
      %366 = vmatpush1.msra.mxu0 0.0
      %367 = vmatprep.subr.mxu0 0.0
      %368 = vmatpush1.msra.mxu0 0.0
      %369 = vmatprep.subr.mxu0 0.0
      %370 = vmatpush1.msra.mxu0 0.0
      %371 = vmatprep.subr.mxu0 0.0
      %372 = vmatpush1.msra.mxu0 0.0
      %373 = vmatprep.subr.mxu0 0.0
      %374 = vmatpush1.msra.mxu0 0.0
      %375 = vmatprep.subr.mxu0 0.0
      %376 = vmatpush1.msra.mxu0 0.0
      %377 = vmatprep.subr.mxu0 0.0
      %378 = vmatpush1.msra.mxu0 0.0
      %379 = vmatprep.subr.mxu0 0.0
      %380 = vmatpush1.msra.mxu0 0.0
      %381 = vmatprep.subr.mxu0 0.0
      %382 = vmatpush1.msra.mxu0 0.0
      %383 = vmatprep.subr.mxu0 0.0
      %384 = vmatpush1.msra.mxu0 0.0
      %385 = vmatprep.subr.mxu0 0.0
      %386 = vmatpush1.msra.mxu0 0.0
      %387 = vmatprep.subr.mxu0 0.0
      %388 = vmatpush1.msra.mxu0 0.0
      %389 = vmatprep.subr.mxu0 0.0
      %390 = vmatpush1.msra.mxu0 0.0
      %391 = vmatprep.mubr.f32.mxu0 0.0
      %392 = vmatmul.mubr.f32.gmra.mrb[0].mxu0 %v276
      %v393 = vpop.f32.mrb[0].mxu0
      %v394 = vadd.f32 %v272, %v393
      %v395 = vpop.f32.mrb[0].mxu0
      %396 = vmatprep.mubr.f32.mxu0 0.0
      %397 = vmatmul.mubr.f32.gmra.mrb[0].mxu0 %v279
      %v398 = vpop.f32.mrb[0].mxu0
      %v399 = vadd.f32 %v272, %v398
      %v400 = vpop.f32.mrb[0].mxu0
      %401 = vmatprep.mubr.f32.mxu0 0.0
      %402 = vmatmul.mubr.f32.gmra.mrb[0].mxu0 %v282
      %v403 = vpop.f32.mrb[0].mxu0
      %v404 = vadd.f32 %v272, %v403
      %v405 = vpop.f32.mrb[0].mxu0
      %406 = vmatprep.mubr.f32.mxu0 0.0
      %407 = vmatmul.mubr.f32.gmra.mrb[0].mxu0 %v285
      %v408 = vpop.f32.mrb[0].mxu0
      %v409 = vadd.f32 %v272, %v408
      %v410 = vpop.f32.mrb[0].mxu0
      %411 = vmatprep.mubr.f32.mxu0 0.0
      %412 = vmatmul.mubr.f32.gmra.mrb[0].mxu0 %v288
      %v413 = vpop.f32.mrb[0].mxu0
      %v414 = vadd.f32 %v272, %v413
      %v415 = vpop.f32.mrb[0].mxu0
      %416 = vmatprep.mubr.f32.mxu0 0.0
      %417 = vmatmul.mubr.f32.gmra.mrb[0].mxu0 %v291
      %v418 = vpop.f32.mrb[0].mxu0
      %v419 = vadd.f32 %v272, %v418
      %v420 = vpop.f32.mrb[0].mxu0
      %421 = vmatprep.mubr.f32.mxu0 0.0
      %422 = vmatmul.mubr.f32.gmra.mrb[0].mxu0 %v294
      %v423 = vpop.f32.mrb[0].mxu0
      %v424 = vadd.f32 %v272, %v423
      %v425 = vpop.f32.mrb[0].mxu0
      %426 = vmatprep.mubr.f32.mxu0 0.0
      %427 = vmatmul.mubr.f32.gmra.mrb[0].mxu0 %v297
      %v428 = vpop.f32.mrb[0].mxu0
      %v429 = vadd.f32 %v272, %v428
      %v430 = vpop.f32.mrb[0].mxu0
      %431 = vmatprep.mubr.f32.mxu0 0.0
      %432 = vmatmul.mubr.f32.gmra.mrb[0].mxu0 %v300
      %v433 = vpop.f32.mrb[0].mxu0
      %v434 = vadd.f32 %v272, %v433
      %v435 = vpop.f32.mrb[0].mxu0
      %436 = vmatprep.mubr.f32.mxu0 0.0
      %437 = vmatmul.mubr.f32.gmra.mrb[0].mxu0 %v303
      %v438 = vpop.f32.mrb[0].mxu0
      %v439 = vadd.f32 %v272, %v438
      %v440 = vpop.f32.mrb[0].mxu0
      %441 = vmatprep.mubr.f32.mxu0 0.0
      %442 = vmatmul.mubr.f32.gmra.mrb[0].mxu0 %v306
      %v443 = vpop.f32.mrb[0].mxu0
      %v444 = vadd.f32 %v272, %v443
      %v445 = vpop.f32.mrb[0].mxu0
      %446 = vmatprep.mubr.f32.mxu0 0.0
      %447 = vmatmul.mubr.f32.gmra.mrb[0].mxu0 %v309
      %v448 = vpop.f32.mrb[0].mxu0
      %v449 = vadd.f32 %v272, %v448
      %v450 = vpop.f32.mrb[0].mxu0
      %451 = vmatprep.mubr.f32.mxu0 0.0
      %452 = vmatmul.mubr.f32.gmra.mrb[0].mxu0 %v312
      %v453 = vpop.f32.mrb[0].mxu0
      %v454 = vadd.f32 %v272, %v453
      %v455 = vpop.f32.mrb[0].mxu0
      %456 = vmatprep.mubr.f32.mxu0 0.0
      %457 = vmatmul.mubr.f32.gmra.mrb[0].mxu0 %v315
      %v458 = vpop.f32.mrb[0].mxu0
      %v459 = vadd.f32 %v272, %v458
      %v460 = vpop.f32.mrb[0].mxu0
      %461 = vmatprep.mubr.f32.mxu0 0.0
      %462 = vmatmul.mubr.f32.gmra.mrb[0].mxu0 %v318
      %v463 = vpop.f32.mrb[0].mxu0
      %v464 = vadd.f32 %v272, %v463
      %v465 = vpop.f32.mrb[0].mxu0
      %466 = vmatprep.mubr.f32.mxu0 0.0
      %467 = vmatmul.mubr.f32.gmra.mrb[0].mxu0 %v321
      %v468 = vpop.f32.mrb[0].mxu0
      %v469 = vadd.f32 %v272, %v468
      %v470 = vpop.f32.mrb[0].mxu0
      %471 = vdwg.mxu0
      %v472 = vtanh.pop %v394
      %v473 = vtanh.pop %v399
      %v474 = vtanh.pop %v404
      %v475 = vtanh.pop %v409
      %v476 = vtanh.pop %v414
      %v477 = vtanh.pop %v419
      %v478 = vtanh.pop %v424
      %v479 = vtanh.pop %v429
      %v480 = vtanh.pop %v434
      %v481 = vtanh.pop %v439
      %v482 = vtanh.pop %v444
      %v483 = vtanh.pop %v449
      %v484 = vtanh.pop %v454
      %v485 = vtanh.pop %v459
      %v486 = vtanh.pop %v464
      %v487 = vtanh.pop %v469
      %v488 = vld [vmem:[%s4] sm:$0xff]
      %v489 = vld [vmem:[%s4 + $0x8] sm:$0x3]
      %vm490 = vcmask 80896
      %v492 = vsel %vm490, %v472, 0
      %v495 = vsel %vm490, %v473, 0
      %v498 = vsel %vm490, %v474, 0
      %v501 = vsel %vm490, %v475, 0
      %v504 = vsel %vm490, %v476, 0
      %v507 = vsel %vm490, %v477, 0
      %v510 = vsel %vm490, %v478, 0
      %v513 = vsel %vm490, %v479, 0
      %v516 = vsel %vm490, %v480, 0
      %v519 = vsel %vm490, %v481, 0
      %v522 = vsel %vm490, %v482, 0
      %v525 = vsel %vm490, %v483, 0
      %v528 = vsel %vm490, %v484, 0
      %v531 = vsel %vm490, %v485, 0
      %v534 = vsel %vm490, %v486, 0
      %v537 = vsel %vm490, %v487, 0
      %vm539 = vcmask 1041408
      %v541 = vsel %vm539, %v489, 0
      %543 = vmatprep.subr.mxu0 0.0
      %544 = vmatpush1.msra.mxu0 %v488
      %545 = vmatprep.subr.mxu0 0.0
      %546 = vmatpush1.msra.mxu0 %v541
      %547 = vmatprep.subr.mxu0 0.0
      %548 = vmatpush1.msra.mxu0 0.0
      %549 = vmatprep.subr.mxu0 0.0
      %550 = vmatpush1.msra.mxu0 0.0
      %551 = vmatprep.subr.mxu0 0.0
      %552 = vmatpush1.msra.mxu0 0.0
      %553 = vmatprep.subr.mxu0 0.0
      %554 = vmatpush1.msra.mxu0 0.0
      %555 = vmatprep.subr.mxu0 0.0
      %556 = vmatpush1.msra.mxu0 0.0
      %557 = vmatprep.subr.mxu0 0.0
      %558 = vmatpush1.msra.mxu0 0.0
      %559 = vmatprep.subr.mxu0 0.0
      %560 = vmatpush1.msra.mxu0 0.0
      %561 = vmatprep.subr.mxu0 0.0
      %562 = vmatpush1.msra.mxu0 0.0
      %563 = vmatprep.subr.mxu0 0.0
      %564 = vmatpush1.msra.mxu0 0.0
      %565 = vmatprep.subr.mxu0 0.0
      %566 = vmatpush1.msra.mxu0 0.0
      %567 = vmatprep.subr.mxu0 0.0
      %568 = vmatpush1.msra.mxu0 0.0
      %569 = vmatprep.subr.mxu0 0.0
      %570 = vmatpush1.msra.mxu0 0.0
      %571 = vmatprep.subr.mxu0 0.0
      %572 = vmatpush1.msra.mxu0 0.0
      %573 = vmatprep.subr.mxu0 0.0
      %574 = vmatpush1.msra.mxu0 0.0
      %575 = vmatprep.subr.mxu0 0.0
      %576 = vmatpush1.msra.mxu0 0.0
      %577 = vmatprep.subr.mxu0 0.0
      %578 = vmatpush1.msra.mxu0 0.0
      %579 = vmatprep.subr.mxu0 0.0
      %580 = vmatpush1.msra.mxu0 0.0
      %581 = vmatprep.subr.mxu0 0.0
      %582 = vmatpush1.msra.mxu0 0.0
      %583 = vmatprep.subr.mxu0 0.0
      %584 = vmatpush1.msra.mxu0 0.0
      %585 = vmatprep.subr.mxu0 0.0
      %586 = vmatpush1.msra.mxu0 0.0
      %587 = vmatprep.subr.mxu0 0.0
      %588 = vmatpush1.msra.mxu0 0.0
      %589 = vmatprep.subr.mxu0 0.0
      %590 = vmatpush1.msra.mxu0 0.0
      %591 = vmatprep.subr.mxu0 0.0
      %592 = vmatpush1.msra.mxu0 0.0
      %593 = vmatprep.subr.mxu0 0.0
      %594 = vmatpush1.msra.mxu0 0.0
      %595 = vmatprep.subr.mxu0 0.0
      %596 = vmatpush1.msra.mxu0 0.0
      %597 = vmatprep.subr.mxu0 0.0
      %598 = vmatpush1.msra.mxu0 0.0
      %599 = vmatprep.subr.mxu0 0.0
      %600 = vmatpush1.msra.mxu0 0.0
      %601 = vmatprep.subr.mxu0 0.0
      %602 = vmatpush1.msra.mxu0 0.0
      %603 = vmatprep.subr.mxu0 0.0
      %604 = vmatpush1.msra.mxu0 0.0
      %605 = vmatprep.subr.mxu0 0.0
      %606 = vmatpush1.msra.mxu0 0.0
      %607 = vmatprep.mubr.f32.mxu0 0.0
      %608 = vmatmul.mubr.f32.gmra.mrb[0].mxu0 %v492
      %v609 = vpop.f32.mrb[0].mxu0
      %v610 = vadd.f32 0.0, %v609
      %v611 = vpop.f32.mrb[0].mxu0
      %612 = vmatprep.mubr.f32.mxu0 0.0
      %613 = vmatmul.mubr.f32.gmra.mrb[0].mxu0 %v495
      %v614 = vpop.f32.mrb[0].mxu0
      %v615 = vadd.f32 0.0, %v614
      %v616 = vpop.f32.mrb[0].mxu0
      %617 = vmatprep.mubr.f32.mxu0 0.0
      %618 = vmatmul.mubr.f32.gmra.mrb[0].mxu0 %v498
      %v619 = vpop.f32.mrb[0].mxu0
      %v620 = vadd.f32 0.0, %v619
      %v621 = vpop.f32.mrb[0].mxu0
      %622 = vmatprep.mubr.f32.mxu0 0.0
      %623 = vmatmul.mubr.f32.gmra.mrb[0].mxu0 %v501
      %v624 = vpop.f32.mrb[0].mxu0
      %v625 = vadd.f32 0.0, %v624
      %v626 = vpop.f32.mrb[0].mxu0
      %627 = vmatprep.mubr.f32.mxu0 0.0
      %628 = vmatmul.mubr.f32.gmra.mrb[0].mxu0 %v504
      %v629 = vpop.f32.mrb[0].mxu0
      %v630 = vadd.f32 0.0, %v629
      %v631 = vpop.f32.mrb[0].mxu0
      %632 = vmatprep.mubr.f32.mxu0 0.0
      %633 = vmatmul.mubr.f32.gmra.mrb[0].mxu0 %v507
      %v634 = vpop.f32.mrb[0].mxu0
      %v635 = vadd.f32 0.0, %v634
      %v636 = vpop.f32.mrb[0].mxu0
      %637 = vmatprep.mubr.f32.mxu0 0.0
      %638 = vmatmul.mubr.f32.gmra.mrb[0].mxu0 %v510
      %v639 = vpop.f32.mrb[0].mxu0
      %v640 = vadd.f32 0.0, %v639
      %v641 = vpop.f32.mrb[0].mxu0
      %642 = vmatprep.mubr.f32.mxu0 0.0
      %643 = vmatmul.mubr.f32.gmra.mrb[0].mxu0 %v513
      %v644 = vpop.f32.mrb[0].mxu0
      %v645 = vadd.f32 0.0, %v644
      %v646 = vpop.f32.mrb[0].mxu0
      %647 = vmatprep.mubr.f32.mxu0 0.0
      %648 = vmatmul.mubr.f32.gmra.mrb[0].mxu0 %v516
      %v649 = vpop.f32.mrb[0].mxu0
      %v650 = vadd.f32 0.0, %v649
      %v651 = vpop.f32.mrb[0].mxu0
      %652 = vmatprep.mubr.f32.mxu0 0.0
      %653 = vmatmul.mubr.f32.gmra.mrb[0].mxu0 %v519
      %v654 = vpop.f32.mrb[0].mxu0
      %v655 = vadd.f32 0.0, %v654
      %v656 = vpop.f32.mrb[0].mxu0
      %657 = vmatprep.mubr.f32.mxu0 0.0
      %658 = vmatmul.mubr.f32.gmra.mrb[0].mxu0 %v522
      %v659 = vpop.f32.mrb[0].mxu0
      %v660 = vadd.f32 0.0, %v659
      %v661 = vpop.f32.mrb[0].mxu0
      %662 = vmatprep.mubr.f32.mxu0 0.0
      %663 = vmatmul.mubr.f32.gmra.mrb[0].mxu0 %v525
      %v664 = vpop.f32.mrb[0].mxu0
      %v665 = vadd.f32 0.0, %v664
      %v666 = vpop.f32.mrb[0].mxu0
      %667 = vmatprep.mubr.f32.mxu0 0.0
      %668 = vmatmul.mubr.f32.gmra.mrb[0].mxu0 %v528
      %v669 = vpop.f32.mrb[0].mxu0
      %v670 = vadd.f32 0.0, %v669
      %v671 = vpop.f32.mrb[0].mxu0
      %672 = vmatprep.mubr.f32.mxu0 0.0
      %673 = vmatmul.mubr.f32.gmra.mrb[0].mxu0 %v531
      %v674 = vpop.f32.mrb[0].mxu0
      %v675 = vadd.f32 0.0, %v674
      %v676 = vpop.f32.mrb[0].mxu0
      %677 = vmatprep.mubr.f32.mxu0 0.0
      %678 = vmatmul.mubr.f32.gmra.mrb[0].mxu0 %v534
      %v679 = vpop.f32.mrb[0].mxu0
      %v680 = vadd.f32 0.0, %v679
      %v681 = vpop.f32.mrb[0].mxu0
      %682 = vmatprep.mubr.f32.mxu0 0.0
      %683 = vmatmul.mubr.f32.gmra.mrb[0].mxu0 %v537
      %v684 = vpop.f32.mrb[0].mxu0
      %v685 = vadd.f32 0.0, %v684
      %v686 = vpop.f32.mrb[0].mxu0
      %687 = vdwg.mxu0
      %v688 = vld [vmem:[%s242] sm:$0xff]
      %v689 = vld [vmem:[%s242 + $0x8] sm:$0xff]
      %v690 = vld [vmem:[%s242 + $0x10] sm:$0xff]
      %v691 = vld [vmem:[%s242 + $0x18] sm:$0xff]
      %v692 = vld [vmem:[%s242 + $0x20] sm:$0xff]
      %v693 = vld [vmem:[%s242 + $0x28] sm:$0xff]
      %v694 = vld [vmem:[%s242 + $0x30] sm:$0xff]
      %v695 = vld [vmem:[%s242 + $0x38] sm:$0xff]
      %v696 = vld [vmem:[%s242 + $0x40] sm:$0xff]
      %v697 = vld [vmem:[%s242 + $0x48] sm:$0xff]
      %v698 = vld [vmem:[%s242 + $0x50] sm:$0xff]
      %v699 = vld [vmem:[%s242 + $0x58] sm:$0xff]
      %v700 = vld [vmem:[%s242 + $0x60] sm:$0xff]
      %v701 = vld [vmem:[%s242 + $0x68] sm:$0xff]
      %v702 = vld [vmem:[%s242 + $0x70] sm:$0xff]
      %v703 = vld [vmem:[%s242 + $0x78] sm:$0xff]
      %705 = vset.pattern.permute.xlu0 0
      %706 = vperm.xlu0 %705, %v688
      %v707 = vpop.permute.xlu0 %706
      %710 = vset.pattern.permute.xlu0 0
      %711 = vperm.xlu0 %710, %v689
      %v712 = vpop.permute.xlu0 %711
      %715 = vset.pattern.permute.xlu0 0
      %716 = vperm.xlu0 %715, %v690
      %v717 = vpop.permute.xlu0 %716
      %720 = vset.pattern.permute.xlu0 0
      %721 = vperm.xlu0 %720, %v691
      %v722 = vpop.permute.xlu0 %721
      %725 = vset.pattern.permute.xlu0 0
      %726 = vperm.xlu0 %725, %v692
      %v727 = vpop.permute.xlu0 %726
      %730 = vset.pattern.permute.xlu0 0
      %731 = vperm.xlu0 %730, %v693
      %v732 = vpop.permute.xlu0 %731
      %735 = vset.pattern.permute.xlu0 0
      %736 = vperm.xlu0 %735, %v694
      %v737 = vpop.permute.xlu0 %736
      %740 = vset.pattern.permute.xlu0 0
      %741 = vperm.xlu0 %740, %v695
      %v742 = vpop.permute.xlu0 %741
      %745 = vset.pattern.permute.xlu0 0
      %746 = vperm.xlu0 %745, %v696
      %v747 = vpop.permute.xlu0 %746
      %750 = vset.pattern.permute.xlu0 0
      %751 = vperm.xlu0 %750, %v697
      %v752 = vpop.permute.xlu0 %751
      %755 = vset.pattern.permute.xlu0 0
      %756 = vperm.xlu0 %755, %v698
      %v757 = vpop.permute.xlu0 %756
      %760 = vset.pattern.permute.xlu0 0
      %761 = vperm.xlu0 %760, %v699
      %v762 = vpop.permute.xlu0 %761
      %765 = vset.pattern.permute.xlu0 0
      %766 = vperm.xlu0 %765, %v700
      %v767 = vpop.permute.xlu0 %766
      %770 = vset.pattern.permute.xlu0 0
      %771 = vperm.xlu0 %770, %v701
      %v772 = vpop.permute.xlu0 %771
      %775 = vset.pattern.permute.xlu0 0
      %776 = vperm.xlu0 %775, %v702
      %v777 = vpop.permute.xlu0 %776
      %780 = vset.pattern.permute.xlu0 0
      %781 = vperm.xlu0 %780, %v703
      %v782 = vpop.permute.xlu0 %781
      %v784 = vmul.f32 %v707, %v610
      %v785 = vmul.f32 %v712, %v615
      %v786 = vmul.f32 %v717, %v620
      %v787 = vmul.f32 %v722, %v625
      %v788 = vmul.f32 %v727, %v630
      %v789 = vmul.f32 %v732, %v635
      %v790 = vmul.f32 %v737, %v640
      %v791 = vmul.f32 %v742, %v645
      %v792 = vmul.f32 %v747, %v650
      %v793 = vmul.f32 %v752, %v655
      %v794 = vmul.f32 %v757, %v660
      %v795 = vmul.f32 %v762, %v665
      %v796 = vmul.f32 %v767, %v670
      %v797 = vmul.f32 %v772, %v675
      %v798 = vmul.f32 %v777, %v680
      %v799 = vmul.f32 %v782, %v685
      %v800 = vpack.c.bf16 %v785, %v784
      %v801 = vpack.c.bf16 %v787, %v786
      %v802 = vpack.c.bf16 %v789, %v788
      %v803 = vpack.c.bf16 %v791, %v790
      %v804 = vpack.c.bf16 %v793, %v792
      %v805 = vpack.c.bf16 %v795, %v794
      %v806 = vpack.c.bf16 %v797, %v796
      %v807 = vpack.c.bf16 %v799, %v798
      %v816 = vunpack.c.l.b16 %v800
      %v817 = vunpack.c.h.b16 %v800
      %v818 = vunpack.c.l.b16 %v801
      %v819 = vunpack.c.h.b16 %v801
      %v820 = vunpack.c.l.b16 %v802
      %v821 = vunpack.c.h.b16 %v802
      %v822 = vunpack.c.l.b16 %v803
      %v823 = vunpack.c.h.b16 %v803
      %v824 = vunpack.c.l.b16 %v804
      %v825 = vunpack.c.h.b16 %v804
      %v826 = vunpack.c.l.b16 %v805
      %v827 = vunpack.c.h.b16 %v805
      %v828 = vunpack.c.l.b16 %v806
      %v829 = vunpack.c.h.b16 %v806
      %v830 = vunpack.c.l.b16 %v807
      %v831 = vunpack.c.h.b16 %v807
      %v832 = vpack.c.b16 %v816, %v816
      %v833 = vpack.c.b16 %v817, %v817
      %v834 = vpack.c.b16 %v818, %v818
      %v835 = vpack.c.b16 %v819, %v819
      %v836 = vpack.c.b16 %v820, %v820
      %v837 = vpack.c.b16 %v821, %v821
      %v838 = vpack.c.b16 %v822, %v822
      %v839 = vpack.c.b16 %v823, %v823
      %v840 = vpack.c.b16 %v824, %v824
      %v841 = vpack.c.b16 %v825, %v825
      %v842 = vpack.c.b16 %v826, %v826
      %v843 = vpack.c.b16 %v827, %v827
      %v844 = vpack.c.b16 %v828, %v828
      %v845 = vpack.c.b16 %v829, %v829
      %v846 = vpack.c.b16 %v830, %v830
      %v847 = vpack.c.b16 %v831, %v831
      %vm864 = vcmask 76800
      %865 = vst.msk [vmem:[%s248] sm:$0xf] %vm864, %v832
      %866 = vst.msk [vmem:[%s248 + $0x4] sm:$0xf] %vm864, %v833
      %867 = vst.msk [vmem:[%s248 + $0x8] sm:$0xf] %vm864, %v834
      %868 = vst.msk [vmem:[%s248 + $0xc] sm:$0xf] %vm864, %v835
      %869 = vst.msk [vmem:[%s248 + $0x10] sm:$0xf] %vm864, %v836
      %870 = vst.msk [vmem:[%s248 + $0x14] sm:$0xf] %vm864, %v837
      %871 = vst.msk [vmem:[%s248 + $0x18] sm:$0xf] %vm864, %v838
      %872 = vst.msk [vmem:[%s248 + $0x1c] sm:$0xf] %vm864, %v839
      %873 = vst.msk [vmem:[%s248 + $0x20] sm:$0xf] %vm864, %v840
      %874 = vst.msk [vmem:[%s248 + $0x24] sm:$0xf] %vm864, %v841
      %875 = vst.msk [vmem:[%s248 + $0x28] sm:$0xf] %vm864, %v842
      %876 = vst.msk [vmem:[%s248 + $0x2c] sm:$0xf] %vm864, %v843
      %877 = vst.msk [vmem:[%s248 + $0x30] sm:$0xf] %vm864, %v844
      %878 = vst.msk [vmem:[%s248 + $0x34] sm:$0xf] %vm864, %v845
      %879 = vst.msk [vmem:[%s248 + $0x38] sm:$0xf] %vm864, %v846
      %880 = vst.msk [vmem:[%s248 + $0x3c] sm:$0xf] %vm864, %v847
      %s881 = smul.u32 16, %s16
      %p882 = scmp.lt.s32.totalorder %s881, 31
      %s883 = scalar_select %p882, %s881, 31
      %s884 = smul.addr %s883, 4
      %s885 = scalar_lea.vmem %s5, %s884
      // Predicated region
      $region41: #{model_forward.3} parent=39 // pred_check
        %p886 = pneg %p149
      $region42: #{model_forward.3} parent=39 // pred_check_branch
        %888 = sbr.rel (%p886) target = $region44
      $region43: #{model_forward.3} parent=39 // pred_region
        %s889 = smul.u32 16, %s16
      $region44: #{model_forward.3} parent=39 // pred_fallthru
        _
    $region40: #{model_forward.3} parent=5 // pred_fallthru
      _
    %p890 = scmp.le.s32.totalorder 2, %s11
    // Predicated region
    $region45: #{model_forward.3} parent=5 // pred_check
      %p891 = pneg %p890
    $region46: #{model_forward.3} parent=5 // pred_check_branch
      %893 = sbr.rel (%p891) target = $region48
    $region47: #{model_forward.3} parent=5 // pred_region
      %s894 = ssub.s32 %s11, 2
      // Predicated region
      $region49: #{model_forward.3} parent=47 // pred_check
        %p895 = pneg %p155
      $region50: #{model_forward.3} parent=47 // pred_check_branch
        %897 = sbr.rel (%p895) target = $region52
      $region51: #{model_forward.3} parent=47 // pred_region
        %s898 = smul.u32 16, %s17
        %p899 = scmp.lt.s32.totalorder %s898, 31
        %s900 = scalar_select %p899, %s898, 31
        %s901 = smul.addr %s900, 4
        %s902 = scalar_lea.vmem %s5, %s901
      $region52: #{model_forward.3} parent=47 // pred_fallthru
        _
    $region48: #{model_forward.3} parent=5 // pred_fallthru
      _
  $region6: #{model_forward.3} parent=0 // loop_footer
    %s15 = sadd.s32 1, %s11
  $region7: #{model_forward.3} parent=0 // loop_footer_branch
    %10 = sbr.rel target = $region3
  $region8: #{model_forward.3} parent=0 // loop_exit
    _

// kernel: model_forward.5
$region0: #{model_forward.5}
  #allocation0 [shape = 'u32[]', space=smem, size = 0x4, offset = 0x4, fixed_abs, tag = 'smem constant byte address 0x4 - core index']
  #allocation1 [shape = 'u32[144,128]{1,0:T(1,128)}', space=vmem, size = 0x12000, scoped, tag = 'internal scratch']
  #allocation2 [shape = 'f32[1,1]{1,0:T(1,128)S(1)}', space=vmem, size = 0x200, scoped, tag = 'scoped memory for model_forward.5']
  %s0 = inlined_call_operand.vmem [shape: f32[256,10], index: 0, kind: input, shape index: {}]
  %s1 = inlined_call_operand.vmem [shape: f32[10,1], index: 1, kind: input, shape index: {}]
  %s2 = inlined_call_operand.<no memory space> [shape: f32[1,1], index: 2, kind: input, shape index: {}]
  %s3 = inlined_call_operand.vmem [shape: f32[256,1], index: 3, kind: output, shape index: {}]
  %s4 = sld [smem:[#allocation0]]
  $region45: #{model_forward.5} parent=0
    _
  %s6 = ssub.s32 1, %s4
  %s7 = scalar_select 0, %s6, %s4
  %v8 = vstv %s2
  %9 = vst [vmem:[#allocation2] sm:$0x1] %v8
  loop: start=0, step=1, limit=4
  $region2: #{model_forward.5} parent=0 // loop_pre_header
    _
  $region3: #{model_forward.5} parent=0 // loop_header
    %s11 = sphi 0, %s15
    %p12 = scmp.ge.s32.totalorder %s11, 4
    %s21 = sphi 0, %s23
    %s24 = sphi 0, %s21
    %s25 = sphi 0, %s24
    %s41 = sphi 0, %s25
    %s45 = sphi 0, %s45
    %s47 = sphi 0, %s45
    %s48 = sphi 0, %s47
    %s62 = sphi 0, %s48
    %s66 = sphi 0, %s66
    %s68 = sphi 0, %s66
    %s69 = sphi 0, %s68
    %s83 = sphi 0, %s69
    %s89 = sphi 0, %s91
    %s92 = sphi 0, %s89
    %s93 = sphi 0, %s92
    %s109 = sphi 0, %s93
  $region4: #{model_forward.5} parent=0 // loop_header_branch
    %14 = sbr.rel (%p12) target = $region8
  $region5: #{model_forward.5} parent=0 // loop_body
    %s16 = ssub.s32 %s11, 1
    %s17 = ssub.s32 %s11, 2
    %s18 = sadd.s32 %s11, 1
    %s19 = ssub.s32 %s11, %s18
    %p20 = scmp.eq.s32.totalorder %s19, 0
    %s22 = sadd.s32 %s21, 1
    %s23 = scalar_select %p20, %s21, %s22
    %p26 = pneg %p20
    %p27 = scmp.eq.s32.totalorder %s11, 1
    %p28 = por %p26, %p27
    %p29 = scmp.ne.s32.totalorder %s21, %s24
    %p30 = scmp.eq.s32.totalorder %s11, 0
    %p31 = por %p29, %p30
    %p32 = scmp.ne.s32.totalorder %s21, %s24
    %p33 = scmp.eq.s32.totalorder %s16, 1
    %p34 = por %p32, %p33
    %p35 = scmp.ne.s32.totalorder %s24, %s25
    %p36 = scmp.eq.s32.totalorder %s16, 0
    %p37 = por %p35, %p36
    %p38 = scmp.ne.s32.totalorder %s24, %s25
    %p39 = scmp.eq.s32.totalorder %s17, 1
    %p40 = por %p38, %p39
    %p42 = scmp.ne.s32.totalorder %s25, %s41
    %p43 = scmp.eq.s32.totalorder %s17, 0
    %p44 = por %p42, %p43
    %s46 = sadd.s32 %s45, 1
    %p49 = scmp.eq.s32.totalorder %s11, 1
    %p50 = scmp.ne.s32.totalorder %s45, %s47
    %p51 = scmp.eq.s32.totalorder %s11, 0
    %p52 = por %p50, %p51
    %p53 = scmp.ne.s32.totalorder %s45, %s47
    %p54 = scmp.eq.s32.totalorder %s16, 1
    %p55 = por %p53, %p54
    %p56 = scmp.ne.s32.totalorder %s47, %s48
    %p57 = scmp.eq.s32.totalorder %s16, 0
    %p58 = por %p56, %p57
    %p59 = scmp.ne.s32.totalorder %s47, %s48
    %p60 = scmp.eq.s32.totalorder %s17, 1
    %p61 = por %p59, %p60
    %p63 = scmp.ne.s32.totalorder %s48, %s62
    %p64 = scmp.eq.s32.totalorder %s17, 0
    %p65 = por %p63, %p64
    %s67 = sadd.s32 %s66, 1
    %p70 = scmp.eq.s32.totalorder %s11, 1
    %p71 = scmp.ne.s32.totalorder %s66, %s68
    %p72 = scmp.eq.s32.totalorder %s11, 0
    %p73 = por %p71, %p72
    %p74 = scmp.ne.s32.totalorder %s66, %s68
    %p75 = scmp.eq.s32.totalorder %s16, 1
    %p76 = por %p74, %p75
    %p77 = scmp.ne.s32.totalorder %s68, %s69
    %p78 = scmp.eq.s32.totalorder %s16, 0
    %p79 = por %p77, %p78
    %p80 = scmp.ne.s32.totalorder %s68, %s69
    %p81 = scmp.eq.s32.totalorder %s17, 1
    %p82 = por %p80, %p81
    %p84 = scmp.ne.s32.totalorder %s69, %s83
    %p85 = scmp.eq.s32.totalorder %s17, 0
    %p86 = por %p84, %p85
    %s87 = ssub.s32 %s11, %s18
    %p88 = scmp.eq.s32.totalorder %s87, 0
    %s90 = sadd.s32 %s89, 1
    %s91 = scalar_select %p88, %s89, %s90
    %p94 = pneg %p88
    %p95 = scmp.eq.s32.totalorder %s11, 1
    %p96 = por %p94, %p95
    %p97 = scmp.ne.s32.totalorder %s89, %s92
    %p98 = scmp.eq.s32.totalorder %s11, 0
    %p99 = por %p97, %p98
    %p100 = scmp.ne.s32.totalorder %s89, %s92
    %p101 = scmp.eq.s32.totalorder %s16, 1
    %p102 = por %p100, %p101
    %p103 = scmp.ne.s32.totalorder %s92, %s93
    %p104 = scmp.eq.s32.totalorder %s16, 0
    %p105 = por %p103, %p104
    %p106 = scmp.ne.s32.totalorder %s92, %s93
    %p107 = scmp.eq.s32.totalorder %s17, 1
    %p108 = por %p106, %p107
    %p110 = scmp.ne.s32.totalorder %s93, %s109
    %p111 = scmp.eq.s32.totalorder %s17, 0
    %p112 = por %p110, %p111
    %p113 = scmp.le.s32.totalorder 1, %s11
    %p114 = scmp.lt.s32.totalorder %s11, 3
    %p115 = pnand %p113, %p114
    %p116 = pneg %p115
    // Predicated region
    $region9: #{model_forward.5} parent=5 // pred_check
      _
    $region10: #{model_forward.5} parent=5 // pred_check_branch
      %118 = sbr.rel (%p115) target = $region12
    $region11: #{model_forward.5} parent=5 // pred_region
      %s119 = ssub.s32 %s11, 1
      // Predicated region
      $region13: #{model_forward.5} parent=11 // pred_check
        %p120 = pneg %p58
      $region14: #{model_forward.5} parent=11 // pred_check_branch
        %122 = sbr.rel (%p120) target = $region16
      $region15: #{model_forward.5} parent=11 // pred_region
        _
      $region16: #{model_forward.5} parent=11 // pred_fallthru
        _
      // Predicated region
      $region17: #{model_forward.5} parent=11 // pred_check
        %p123 = pneg %p79
      $region18: #{model_forward.5} parent=11 // pred_check_branch
        %125 = sbr.rel (%p123) target = $region20
      $region19: #{model_forward.5} parent=11 // pred_region
        _
      $region20: #{model_forward.5} parent=11 // pred_fallthru
        _
    $region12: #{model_forward.5} parent=5 // pred_fallthru
      _
    %p126 = scmp.lt.s32.totalorder %s11, 2
    // Predicated region
    $region21: #{model_forward.5} parent=5 // pred_check
      %p127 = pneg %p126
    $region22: #{model_forward.5} parent=5 // pred_check_branch
      %129 = sbr.rel (%p127) target = $region24
    $region23: #{model_forward.5} parent=5 // pred_region
      // Predicated region
      $region25: #{model_forward.5} parent=23 // pred_check
        %p130 = pneg %p31
      $region26: #{model_forward.5} parent=23 // pred_check_branch
        %132 = sbr.rel (%p130) target = $region28
      $region27: #{model_forward.5} parent=23 // pred_region
        %s133 = smul.u32 16, %s11
        %p134 = scmp.lt.s32.totalorder %s133, 31
        %s135 = scalar_select %p134, %s133, 31
        %s136 = smul.addr %s135, 8
        %s137 = scalar_lea.vmem %s0, %s136
        %s138 = smul.u32 16, %s11
      $region28: #{model_forward.5} parent=23 // pred_fallthru
        _
    $region24: #{model_forward.5} parent=5 // pred_fallthru
      _
    %p139 = scmp.le.s32.totalorder 1, %s11
    %p140 = scmp.lt.s32.totalorder %s11, 3
    %p141 = pnand %p139, %p140
    %p142 = pneg %p141
    // Predicated region
    $region29: #{model_forward.5} parent=5 // pred_check
      _
    $region30: #{model_forward.5} parent=5 // pred_check_branch
      %144 = sbr.rel (%p141) target = $region32
    $region31: #{model_forward.5} parent=5 // pred_region
      %s145 = ssub.s32 %s11, 1
      %s146 = smul.u32 16, %s16
      %p147 = scmp.lt.s32.totalorder %s146, 31
      %s148 = scalar_select %p147, %s146, 31
      %s149 = smul.addr %s148, 8
      %s150 = scalar_lea.vmem %s0, %s149
      %p151 = pneg %p37
      %p152 = pneg %p34
      %p153 = pneg %p58
      %p154 = pneg %p55
      %p155 = pneg %p79
      %p156 = pneg %p76
      %p157 = pneg %p105
      %p158 = pneg %p102
      %s159 = smul.u32 16, %s16
      %p160 = scmp.lt.s32.totalorder %s159, 31
      %s161 = scalar_select %p160, %s159, 31
      %s162 = smul.addr %s161, 8
      %s163 = scalar_lea.vmem %s3, %s162
      %s164 = smul.u32 16, %s16
      %p165 = scmp.lt.s32.totalorder %s164, 31
      %s166 = scalar_select %p165, %s164, 31
      %s167 = smul.addr %s166, 8
      %s168 = scalar_lea.vmem %s0, %s167
      %s169 = smul.u32 16, %s16
      %s170 = smul.u32 16, %s16
      %p171 = scmp.lt.s32.totalorder %s170, 31
      %s172 = scalar_select %p171, %s170, 31
      %s173 = smul.addr %s172, 8
      %s174 = scalar_lea.vmem %s3, %s173
      %s175 = smul.u32 16, %s16
      %v176 = vld [vmem:[%s168] sm:$0xff]
      %v177 = vld [vmem:[%s168 + $0x8] sm:$0xff]
      %v178 = vld [vmem:[%s168 + $0x10] sm:$0xff]
      %v179 = vld [vmem:[%s168 + $0x18] sm:$0xff]
      %v180 = vld [vmem:[%s168 + $0x20] sm:$0xff]
      %v181 = vld [vmem:[%s168 + $0x28] sm:$0xff]
      %v182 = vld [vmem:[%s168 + $0x30] sm:$0xff]
      %v183 = vld [vmem:[%s168 + $0x38] sm:$0xff]
      %v184 = vld [vmem:[%s168 + $0x40] sm:$0xff]
      %v185 = vld [vmem:[%s168 + $0x48] sm:$0xff]
      %v186 = vld [vmem:[%s168 + $0x50] sm:$0xff]
      %v187 = vld [vmem:[%s168 + $0x58] sm:$0xff]
      %v188 = vld [vmem:[%s168 + $0x60] sm:$0xff]
      %v189 = vld [vmem:[%s168 + $0x68] sm:$0xff]
      %v190 = vld [vmem:[%s168 + $0x70] sm:$0xff]
      %v191 = vld [vmem:[%s168 + $0x78] sm:$0xff]
      %v192 = vld [vmem:[%s1] sm:$0xff]
      %v193 = vld [vmem:[%s1 + $0x8] sm:$0x3]
      %v194 = vld [vmem:[#allocation2] sm:$0x1]
      %v196 = vlaneseq
      %v197 = vshrl.u32 %v196, 7
      %v198 = vsub.s32 0, %v197
      %v199 = vrot.slane %v194, %v198
      %vm201 = vcmask 80896
      %v203 = vsel %vm201, %v176, 0
      %v206 = vsel %vm201, %v177, 0
      %v209 = vsel %vm201, %v178, 0
      %v212 = vsel %vm201, %v179, 0
      %v215 = vsel %vm201, %v180, 0
      %v218 = vsel %vm201, %v181, 0
      %v221 = vsel %vm201, %v182, 0
      %v224 = vsel %vm201, %v183, 0
      %v227 = vsel %vm201, %v184, 0
      %v230 = vsel %vm201, %v185, 0
      %v233 = vsel %vm201, %v186, 0
      %v236 = vsel %vm201, %v187, 0
      %v239 = vsel %vm201, %v188, 0
      %v242 = vsel %vm201, %v189, 0
      %v245 = vsel %vm201, %v190, 0
      %v248 = vsel %vm201, %v191, 0
      %vm250 = vcmask 1041408
      %v252 = vsel %vm250, %v193, 0
      %254 = vmatprep.subr.mxu0 0.0
      %255 = vmatpush1.msra.mxu0 %v192
      %256 = vmatprep.subr.mxu0 0.0
      %257 = vmatpush1.msra.mxu0 %v252
      %258 = vmatprep.subr.mxu0 0.0
      %259 = vmatpush1.msra.mxu0 0.0
      %260 = vmatprep.subr.mxu0 0.0
      %261 = vmatpush1.msra.mxu0 0.0
      %262 = vmatprep.subr.mxu0 0.0
      %263 = vmatpush1.msra.mxu0 0.0
      %264 = vmatprep.subr.mxu0 0.0
      %265 = vmatpush1.msra.mxu0 0.0
      %266 = vmatprep.subr.mxu0 0.0
      %267 = vmatpush1.msra.mxu0 0.0
      %268 = vmatprep.subr.mxu0 0.0
      %269 = vmatpush1.msra.mxu0 0.0
      %270 = vmatprep.subr.mxu0 0.0
      %271 = vmatpush1.msra.mxu0 0.0
      %272 = vmatprep.subr.mxu0 0.0
      %273 = vmatpush1.msra.mxu0 0.0
      %274 = vmatprep.subr.mxu0 0.0
      %275 = vmatpush1.msra.mxu0 0.0
      %276 = vmatprep.subr.mxu0 0.0
      %277 = vmatpush1.msra.mxu0 0.0
      %278 = vmatprep.subr.mxu0 0.0
      %279 = vmatpush1.msra.mxu0 0.0
      %280 = vmatprep.subr.mxu0 0.0
      %281 = vmatpush1.msra.mxu0 0.0
      %282 = vmatprep.subr.mxu0 0.0
      %283 = vmatpush1.msra.mxu0 0.0
      %284 = vmatprep.subr.mxu0 0.0
      %285 = vmatpush1.msra.mxu0 0.0
      %286 = vmatprep.subr.mxu0 0.0
      %287 = vmatpush1.msra.mxu0 0.0
      %288 = vmatprep.subr.mxu0 0.0
      %289 = vmatpush1.msra.mxu0 0.0
      %290 = vmatprep.subr.mxu0 0.0
      %291 = vmatpush1.msra.mxu0 0.0
      %292 = vmatprep.subr.mxu0 0.0
      %293 = vmatpush1.msra.mxu0 0.0
      %294 = vmatprep.subr.mxu0 0.0
      %295 = vmatpush1.msra.mxu0 0.0
      %296 = vmatprep.subr.mxu0 0.0
      %297 = vmatpush1.msra.mxu0 0.0
      %298 = vmatprep.subr.mxu0 0.0
      %299 = vmatpush1.msra.mxu0 0.0
      %300 = vmatprep.subr.mxu0 0.0
      %301 = vmatpush1.msra.mxu0 0.0
      %302 = vmatprep.subr.mxu0 0.0
      %303 = vmatpush1.msra.mxu0 0.0
      %304 = vmatprep.subr.mxu0 0.0
      %305 = vmatpush1.msra.mxu0 0.0
      %306 = vmatprep.subr.mxu0 0.0
      %307 = vmatpush1.msra.mxu0 0.0
      %308 = vmatprep.subr.mxu0 0.0
      %309 = vmatpush1.msra.mxu0 0.0
      %310 = vmatprep.subr.mxu0 0.0
      %311 = vmatpush1.msra.mxu0 0.0
      %312 = vmatprep.subr.mxu0 0.0
      %313 = vmatpush1.msra.mxu0 0.0
      %314 = vmatprep.subr.mxu0 0.0
      %315 = vmatpush1.msra.mxu0 0.0
      %316 = vmatprep.subr.mxu0 0.0
      %317 = vmatpush1.msra.mxu0 0.0
      %318 = vmatprep.mubr.f32.mxu0 0.0
      %319 = vmatmul.mubr.f32.gmra.mrb[0].mxu0 %v203
      %v320 = vpop.f32.mrb[0].mxu0
      %v321 = vadd.f32 %v199, %v320
      %v322 = vpop.f32.mrb[0].mxu0
      %323 = vmatprep.mubr.f32.mxu0 0.0
      %324 = vmatmul.mubr.f32.gmra.mrb[0].mxu0 %v206
      %v325 = vpop.f32.mrb[0].mxu0
      %v326 = vadd.f32 %v199, %v325
      %v327 = vpop.f32.mrb[0].mxu0
      %328 = vmatprep.mubr.f32.mxu0 0.0
      %329 = vmatmul.mubr.f32.gmra.mrb[0].mxu0 %v209
      %v330 = vpop.f32.mrb[0].mxu0
      %v331 = vadd.f32 %v199, %v330
      %v332 = vpop.f32.mrb[0].mxu0
      %333 = vmatprep.mubr.f32.mxu0 0.0
      %334 = vmatmul.mubr.f32.gmra.mrb[0].mxu0 %v212
      %v335 = vpop.f32.mrb[0].mxu0
      %v336 = vadd.f32 %v199, %v335
      %v337 = vpop.f32.mrb[0].mxu0
      %338 = vmatprep.mubr.f32.mxu0 0.0
      %339 = vmatmul.mubr.f32.gmra.mrb[0].mxu0 %v215
      %v340 = vpop.f32.mrb[0].mxu0
      %v341 = vadd.f32 %v199, %v340
      %v342 = vpop.f32.mrb[0].mxu0
      %343 = vmatprep.mubr.f32.mxu0 0.0
      %344 = vmatmul.mubr.f32.gmra.mrb[0].mxu0 %v218
      %v345 = vpop.f32.mrb[0].mxu0
      %v346 = vadd.f32 %v199, %v345
      %v347 = vpop.f32.mrb[0].mxu0
      %348 = vmatprep.mubr.f32.mxu0 0.0
      %349 = vmatmul.mubr.f32.gmra.mrb[0].mxu0 %v221
      %v350 = vpop.f32.mrb[0].mxu0
      %v351 = vadd.f32 %v199, %v350
      %v352 = vpop.f32.mrb[0].mxu0
      %353 = vmatprep.mubr.f32.mxu0 0.0
      %354 = vmatmul.mubr.f32.gmra.mrb[0].mxu0 %v224
      %v355 = vpop.f32.mrb[0].mxu0
      %v356 = vadd.f32 %v199, %v355
      %v357 = vpop.f32.mrb[0].mxu0
      %358 = vmatprep.mubr.f32.mxu0 0.0
      %359 = vmatmul.mubr.f32.gmra.mrb[0].mxu0 %v227
      %v360 = vpop.f32.mrb[0].mxu0
      %v361 = vadd.f32 %v199, %v360
      %v362 = vpop.f32.mrb[0].mxu0
      %363 = vmatprep.mubr.f32.mxu0 0.0
      %364 = vmatmul.mubr.f32.gmra.mrb[0].mxu0 %v230
      %v365 = vpop.f32.mrb[0].mxu0
      %v366 = vadd.f32 %v199, %v365
      %v367 = vpop.f32.mrb[0].mxu0
      %368 = vmatprep.mubr.f32.mxu0 0.0
      %369 = vmatmul.mubr.f32.gmra.mrb[0].mxu0 %v233
      %v370 = vpop.f32.mrb[0].mxu0
      %v371 = vadd.f32 %v199, %v370
      %v372 = vpop.f32.mrb[0].mxu0
      %373 = vmatprep.mubr.f32.mxu0 0.0
      %374 = vmatmul.mubr.f32.gmra.mrb[0].mxu0 %v236
      %v375 = vpop.f32.mrb[0].mxu0
      %v376 = vadd.f32 %v199, %v375
      %v377 = vpop.f32.mrb[0].mxu0
      %378 = vmatprep.mubr.f32.mxu0 0.0
      %379 = vmatmul.mubr.f32.gmra.mrb[0].mxu0 %v239
      %v380 = vpop.f32.mrb[0].mxu0
      %v381 = vadd.f32 %v199, %v380
      %v382 = vpop.f32.mrb[0].mxu0
      %383 = vmatprep.mubr.f32.mxu0 0.0
      %384 = vmatmul.mubr.f32.gmra.mrb[0].mxu0 %v242
      %v385 = vpop.f32.mrb[0].mxu0
      %v386 = vadd.f32 %v199, %v385
      %v387 = vpop.f32.mrb[0].mxu0
      %388 = vmatprep.mubr.f32.mxu0 0.0
      %389 = vmatmul.mubr.f32.gmra.mrb[0].mxu0 %v245
      %v390 = vpop.f32.mrb[0].mxu0
      %v391 = vadd.f32 %v199, %v390
      %v392 = vpop.f32.mrb[0].mxu0
      %393 = vmatprep.mubr.f32.mxu0 0.0
      %394 = vmatmul.mubr.f32.gmra.mrb[0].mxu0 %v248
      %v395 = vpop.f32.mrb[0].mxu0
      %v396 = vadd.f32 %v199, %v395
      %v397 = vpop.f32.mrb[0].mxu0
      %398 = vdwg.mxu0
      %vm399 = vcmask 7168
      %400 = vst.msk [vmem:[%s174] sm:$0xff] %vm399, %v321
      %401 = vst.msk [vmem:[%s174 + $0x8] sm:$0xff] %vm399, %v326
      %402 = vst.msk [vmem:[%s174 + $0x10] sm:$0xff] %vm399, %v331
      %403 = vst.msk [vmem:[%s174 + $0x18] sm:$0xff] %vm399, %v336
      %404 = vst.msk [vmem:[%s174 + $0x20] sm:$0xff] %vm399, %v341
      %405 = vst.msk [vmem:[%s174 + $0x28] sm:$0xff] %vm399, %v346
      %406 = vst.msk [vmem:[%s174 + $0x30] sm:$0xff] %vm399, %v351
      %407 = vst.msk [vmem:[%s174 + $0x38] sm:$0xff] %vm399, %v356
      %408 = vst.msk [vmem:[%s174 + $0x40] sm:$0xff] %vm399, %v361
      %409 = vst.msk [vmem:[%s174 + $0x48] sm:$0xff] %vm399, %v366
      %410 = vst.msk [vmem:[%s174 + $0x50] sm:$0xff] %vm399, %v371
      %411 = vst.msk [vmem:[%s174 + $0x58] sm:$0xff] %vm399, %v376
      %412 = vst.msk [vmem:[%s174 + $0x60] sm:$0xff] %vm399, %v381
      %413 = vst.msk [vmem:[%s174 + $0x68] sm:$0xff] %vm399, %v386
      %414 = vst.msk [vmem:[%s174 + $0x70] sm:$0xff] %vm399, %v391
      %415 = vst.msk [vmem:[%s174 + $0x78] sm:$0xff] %vm399, %v396
      %s416 = smul.u32 16, %s16
      %p417 = scmp.lt.s32.totalorder %s416, 31
      %s418 = scalar_select %p417, %s416, 31
      %s419 = smul.addr %s418, 8
      %s420 = scalar_lea.vmem %s3, %s419
      // Predicated region
      $region33: #{model_forward.5} parent=31 // pred_check
        %p421 = pneg %p102
      $region34: #{model_forward.5} parent=31 // pred_check_branch
        %423 = sbr.rel (%p421) target = $region36
      $region35: #{model_forward.5} parent=31 // pred_region
        %s424 = smul.u32 16, %s16
      $region36: #{model_forward.5} parent=31 // pred_fallthru
        _
    $region32: #{model_forward.5} parent=5 // pred_fallthru
      _
    %p425 = scmp.le.s32.totalorder 2, %s11
    // Predicated region
    $region37: #{model_forward.5} parent=5 // pred_check
      %p426 = pneg %p425
    $region38: #{model_forward.5} parent=5 // pred_check_branch
      %428 = sbr.rel (%p426) target = $region40
    $region39: #{model_forward.5} parent=5 // pred_region
      %s429 = ssub.s32 %s11, 2
      // Predicated region
      $region41: #{model_forward.5} parent=39 // pred_check
        %p430 = pneg %p108
      $region42: #{model_forward.5} parent=39 // pred_check_branch
        %432 = sbr.rel (%p430) target = $region44
      $region43: #{model_forward.5} parent=39 // pred_region
        %s433 = smul.u32 16, %s17
        %p434 = scmp.lt.s32.totalorder %s433, 31
        %s435 = scalar_select %p434, %s433, 31
        %s436 = smul.addr %s435, 8
        %s437 = scalar_lea.vmem %s3, %s436
      $region44: #{model_forward.5} parent=39 // pred_fallthru
        _
    $region40: #{model_forward.5} parent=5 // pred_fallthru
      _
  $region6: #{model_forward.5} parent=0 // loop_footer
    %s15 = sadd.s32 1, %s11
  $region7: #{model_forward.5} parent=0 // loop_footer_branch
    %10 = sbr.rel target = $region3
  $region8: #{model_forward.5} parent=0 // loop_exit
    _

</llo_original>
